<compile_context>
chip_gen: v6e
topology: v6e:2x2x1
jax: 0.10.0
libtpu: 0.0.40
codegen_flags: <defaults>
</compile_context>

<pallas_src>
import functools

import jax
import jax.numpy as jnp
from jax.experimental import pallas as pl
from jax.experimental.pallas import tpu as pltpu

EPS = 1e-5


def _layernorm(t, gamma, beta):
    # PyTorch nn.LayerNorm: biased variance, eps=1e-5, elementwise affine.
    mu = jnp.mean(t, axis=-1, keepdims=True)
    var = jnp.mean((t - mu) ** 2, axis=-1, keepdims=True)
    return (t - mu) * jax.lax.rsqrt(var + EPS) * gamma + beta


def encoder_block_kernel(
    x_ref,                       # (S, E)   one batch element's rows
    wq_ref, wk_ref, wv_ref,      # (E, E)   head-fused + pre-transposed
    wo_ref,                      # (E, E)   pre-transposed
    w1_ref,                      # (E, M)   pre-transposed
    w2_ref,                      # (M, E)   pre-transposed
    vec_ref,                     # (10, max(E, M)) packed biases / LN params
    o_ref,                       # (S, E)
    *, num_heads,
):
    x = x_ref[...]                                        # [S, E]
    emb = x.shape[-1]
    mlp = w1_ref.shape[-1]
    hd = emb // num_heads

    # ---- unpack the fused bias / LayerNorm operand (static slices, trace-time) ----
    vecs = vec_ref[...]
    bq, bk, bv = vecs[0:1, :emb], vecs[1:2, :emb], vecs[2:3, :emb]
    bo = vecs[3:4, :emb]
    ln1g, ln1b = vecs[4:5, :emb], vecs[5:6, :emb]
    bf1 = vecs[6:7, :mlp]
    bf2 = vecs[7:8, :emb]
    ln2g, ln2b = vecs[8:9, :emb], vecs[9:10, :emb]

    # ---- fused QKV projections: three full-width K=E MXU matmuls ----
    q = jnp.dot(x, wq_ref[...], preferred_element_type=jnp.float32) + bq   # [S, E]
    k = jnp.dot(x, wk_ref[...], preferred_element_type=jnp.float32) + bk
    v = jnp.dot(x, wv_ref[...], preferred_element_type=jnp.float32) + bv

    # ---- head-batched attention: stack static lane slices to [H, S, hd] ----
    q3 = jnp.stack([q[:, h * hd:(h + 1) * hd] for h in range(num_heads)], axis=0)
    k3 = jnp.stack([k[:, h * hd:(h + 1) * hd] for h in range(num_heads)], axis=0)
    v3 = jnp.stack([v[:, h * hd:(h + 1) * hd] for h in range(num_heads)], axis=0)

    # NOTE: no 1/sqrt(hd) scaling, matching the reference module.
    s = jnp.einsum('hqd,hkd->hqk', q3, k3,
                   preferred_element_type=jnp.float32)    # [H, S, S]
    s = s - jnp.max(s, axis=-1, keepdims=True)
    e = jnp.exp(s)
    p = e * pl.reciprocal(jnp.sum(e, axis=-1, keepdims=True), approx=False)
    ctx = jnp.einsum('hqk,hkd->hqd', p, v3,
                     preferred_element_type=jnp.float32)  # [H, S, hd]

    # ---- head concat (lane placement) + ONE output-projection matmul (K = E) ----
    concat = jnp.concatenate([ctx[h] for h in range(num_heads)], axis=-1)  # [S, E]
    mha = jnp.dot(concat, wo_ref[...], preferred_element_type=jnp.float32) + bo

    # ---- residual + LayerNorm 1 (no scratch round trip) ----
    y = _layernorm(x + mha, ln1g, ln1b)

    # ---- FFN: Linear(E->M) -> ReLU -> Linear(M->E) ----
    h1 = jnp.maximum(jnp.dot(y, w1_ref[...], preferred_element_type=jnp.float32) + bf1, 0.0)
    ff = jnp.dot(h1, w2_ref[...], preferred_element_type=jnp.float32) + bf2

    # ---- residual + LayerNorm 2 ----
    o_ref[...] = _layernorm(ff + y, ln2g, ln2b)


@functools.partial(jax.jit, static_argnames=("num_heads",))
def encoder_block(x, params, *, num_heads):
    B, S, E = x.shape
    (wq, bq, wk, bk, wv, bv, wo, bo,
     ln1g, ln1b, w1, bf1, w2, bf2, ln2g, ln2b) = params
    H = num_heads
    M = w1.shape[0]

    # ---- wrapper-side layout prep (free XLA work; keeps the kernel transpose-free) ----
    wq_t = wq.reshape(E, E).T      # [E_in, H*hd]: q[:, h*hd:(h+1)*hd] == x @ wq[h].T
    wk_t = wk.reshape(E, E).T
    wv_t = wv.reshape(E, E).T
    wo_t = wo.T                    # [E_in(concat), E_out]
    w1_t = w1.T                    # [E, M]
    w2_t = w2.T                    # [M, E]

    # Pack the 10 tiny bias / LN vectors into ONE padded [10, max(E, M)] operand.
    P = max(E, M)

    def row(vec):
        return jnp.pad(vec, ((0, 0), (0, P - vec.shape[-1])))

    vecs = jnp.concatenate(
        [row(bq.reshape(1, E)), row(bk.reshape(1, E)), row(bv.reshape(1, E)),
         row(bo), row(ln1g), row(ln1b), row(bf1), row(bf2), row(ln2g), row(ln2b)],
        axis=0).astype(jnp.float32)                        # (10, P)

    x2 = x.reshape(B * S, E)       # row slab; one grid step per batch element

    def const_spec(shape):
        return pl.BlockSpec(shape, lambda b: (0,) * len(shape))

    operands = (x2, wq_t, wk_t, wv_t, wo_t, w1_t, w2_t, vecs)
    in_specs = [pl.BlockSpec((S, E), lambda b: (b, 0))] + \
               [const_spec(a.shape) for a in operands[1:]]

    kernel = functools.partial(encoder_block_kernel, num_heads=H)

    out = pl.pallas_call(
        kernel,
        out_shape=jax.ShapeDtypeStruct((B * S, E), jnp.float32),
        grid=(B,),
        in_specs=in_specs,
        out_specs=pl.BlockSpec((S, E), lambda b: (b, 0)),
        compiler_params=pltpu.CompilerParams(
            dimension_semantics=("parallel",)),
    )(*operands)
    return out.reshape(B, S, E)


# ---------------- pure-JAX reference (mirrors the PyTorch forward) ----------------
def reference_encoder_block(x, params, num_heads):
    (wq, bq, wk, bk, wv, bv, wo, bo,
     ln1g, ln1b, w1, bf1, w2, bf2, ln2g, ln2b) = params

    heads = []
    for h in range(num_heads):
        q = jnp.einsum("bse,de->bsd", x, wq[h]) + bq[h]
        k = jnp.einsum("bse,de->bsd", x, wk[h]) + bk[h]
        v = jnp.einsum("bse,de->bsd", x, wv[h]) + bv[h]
        a = jax.nn.softmax(jnp.einsum("bid,bjd->bij", q, k), axis=-1)
        heads.append(jnp.einsum("bij,bjd->bid", a, v))
    concat = jnp.concatenate(heads, axis=-1)
    mha = jnp.einsum("bse,oe->bso", concat, wo) + bo

    y = _layernorm(x + mha, ln1g, ln1b)
    ff = jnp.einsum("bsm,em->bse",
                    jnp.maximum(jnp.einsum("bse,me->bsm", y, w1) + bf1, 0.0),
                    w2) + bf2
    return _layernorm(ff + y, ln2g, ln2b)


def make_params(key, embedding_dim, num_heads, mlp_dimension):
    hd = embedding_dim // num_heads
    ks = jax.random.split(key, 12)
    n = lambda k, shape: (0.05 * jax.random.normal(k, shape)).astype(jnp.float32)

    wq = n(ks[0], (num_heads, hd, embedding_dim))
    bq = n(ks[1], (num_heads, 1, hd))
    wk = n(ks[2], (num_heads, hd, embedding_dim))
    bk = n(ks[3], (num_heads, 1, hd))
    wv = n(ks[4], (num_heads, hd, embedding_dim))
    bv = n(ks[5], (num_heads, 1, hd))
    wo = n(ks[6], (embedding_dim, embedding_dim))
    bo = n(ks[7], (1, embedding_dim))
    ln1g = jnp.ones((1, embedding_dim), jnp.float32)
    ln1b = jnp.zeros((1, embedding_dim), jnp.float32)
    w1 = n(ks[8], (mlp_dimension, embedding_dim))
    bf1 = n(ks[9], (1, mlp_dimension))
    w2 = n(ks[10], (embedding_dim, mlp_dimension))
    bf2 = n(ks[11], (1, embedding_dim))
    ln2g = jnp.ones((1, embedding_dim), jnp.float32)
    ln2b = jnp.zeros((1, embedding_dim), jnp.float32)
    # TODO(synk): AttentionHead.weight_head is defined in __init__ but unused in
    # forward() of the reference module, so it is intentionally omitted here.
    return (wq, bq, wk, bk, wv, bv, wo, bo,
            ln1g, ln1b, w1, bf1, w2, bf2, ln2g, ln2b)


if __name__ == "__main__":
    B, S, E, H, M = 2, 8, 32, 4, 64

    key = jax.random.PRNGKey(0)
    kx, kp = jax.random.split(key)
    x = jax.random.normal(kx, (B, S, E), dtype=jnp.float32)
    params = make_params(kp, E, H, M)

    out = encoder_block(x, params, num_heads=H)
    out = jax.block_until_ready(out)

    ref = reference_encoder_block(x, params, H)
    assert out.shape == (B, S, E)
    # Exact reciprocal in the softmax (approx=False) -> tight f32 parity.
    assert jnp.allclose(out, ref, atol=1e-3, rtol=1e-3), "mismatch vs reference"

    print("KERNEL_OK")
</pallas_src>

<mosaic_0001>
module attributes {stable_mosaic.version = 11 : i64} {
  func.func @encoder_block_kernel(%arg0: i32, %arg1: memref<8x32xf32, #tpu.memory_space<vmem>>, %arg2: memref<32x32xf32, #tpu.memory_space<vmem>>, %arg3: memref<32x32xf32, #tpu.memory_space<vmem>>, %arg4: memref<32x32xf32, #tpu.memory_space<vmem>>, %arg5: memref<32x32xf32, #tpu.memory_space<vmem>>, %arg6: memref<32x64xf32, #tpu.memory_space<vmem>>, %arg7: memref<64x32xf32, #tpu.memory_space<vmem>>, %arg8: memref<10x64xf32, #tpu.memory_space<vmem>>, %arg9: memref<8x32xf32, #tpu.memory_space<vmem>>) attributes {dimension_semantics = [#tpu.dimension_semantics<parallel>], iteration_bounds = array<i64: 2>, scalar_prefetch = 0 : i64, scratch_operands = 0 : i64, tpu.core_type = #tpu.core_type<tc>, window_params = [{transform_indices = @transform_0, window_bounds = array<i64: 8, 32>}, {pipeline_mode = #tpu.pipeline_mode<synchronous>, transform_indices = @transform_1, window_bounds = array<i64: 32, 32>}, {pipeline_mode = #tpu.pipeline_mode<synchronous>, transform_indices = @transform_2, window_bounds = array<i64: 32, 32>}, {pipeline_mode = #tpu.pipeline_mode<synchronous>, transform_indices = @transform_3, window_bounds = array<i64: 32, 32>}, {pipeline_mode = #tpu.pipeline_mode<synchronous>, transform_indices = @transform_4, window_bounds = array<i64: 32, 32>}, {pipeline_mode = #tpu.pipeline_mode<synchronous>, transform_indices = @transform_5, window_bounds = array<i64: 32, 64>}, {pipeline_mode = #tpu.pipeline_mode<synchronous>, transform_indices = @transform_6, window_bounds = array<i64: 64, 32>}, {pipeline_mode = #tpu.pipeline_mode<synchronous>, transform_indices = @transform_7, window_bounds = array<i64: 10, 64>}, {transform_indices = @transform_8, window_bounds = array<i64: 8, 32>}]} {
    %c0 = arith.constant 0 : index
    %c0_0 = arith.constant 0 : index
    %0 = vector.load %arg1[%c0, %c0_0] : memref<8x32xf32, #tpu.memory_space<vmem>>, vector<8x32xf32>
    %c0_1 = arith.constant 0 : index
    %c0_2 = arith.constant 0 : index
    %1 = vector.load %arg8[%c0_1, %c0_2] : memref<10x64xf32, #tpu.memory_space<vmem>>, vector<10x64xf32>
    %2 = vector.extract_strided_slice %1 {offsets = [0, 0], sizes = [1, 32], strides = [1, 1]} : vector<10x64xf32> to vector<1x32xf32>
    %3 = vector.extract_strided_slice %1 {offsets = [1, 0], sizes = [1, 32], strides = [1, 1]} : vector<10x64xf32> to vector<1x32xf32>
    %4 = vector.extract_strided_slice %1 {offsets = [2, 0], sizes = [1, 32], strides = [1, 1]} : vector<10x64xf32> to vector<1x32xf32>
    %5 = vector.extract_strided_slice %1 {offsets = [3, 0], sizes = [1, 32], strides = [1, 1]} : vector<10x64xf32> to vector<1x32xf32>
    %6 = vector.extract_strided_slice %1 {offsets = [4, 0], sizes = [1, 32], strides = [1, 1]} : vector<10x64xf32> to vector<1x32xf32>
    %7 = vector.extract_strided_slice %1 {offsets = [5, 0], sizes = [1, 32], strides = [1, 1]} : vector<10x64xf32> to vector<1x32xf32>
    %8 = vector.extract_strided_slice %1 {offsets = [6, 0], sizes = [1, 64], strides = [1, 1]} : vector<10x64xf32> to vector<1x64xf32>
    %9 = vector.extract_strided_slice %1 {offsets = [7, 0], sizes = [1, 32], strides = [1, 1]} : vector<10x64xf32> to vector<1x32xf32>
    %10 = vector.extract_strided_slice %1 {offsets = [8, 0], sizes = [1, 32], strides = [1, 1]} : vector<10x64xf32> to vector<1x32xf32>
    %11 = vector.extract_strided_slice %1 {offsets = [9, 0], sizes = [1, 32], strides = [1, 1]} : vector<10x64xf32> to vector<1x32xf32>
    %c0_3 = arith.constant 0 : index
    %c0_4 = arith.constant 0 : index
    %12 = vector.load %arg2[%c0_3, %c0_4] : memref<32x32xf32, #tpu.memory_space<vmem>>, vector<32x32xf32>
    %cst = arith.constant dense<0.000000e+00> : vector<8x32xf32>
    %13 = tpu.matmul %0, %12, %cst {dimension_numbers = #tpu.dot_dimension_numbers<[1], [0], [0], [1], [0, 0, 1, 1], [], []>} : vector<8x32xf32>, vector<32x32xf32>, vector<8x32xf32> -> vector<8x32xf32>
    %14 = vector.broadcast %2 : vector<1x32xf32> to vector<8x32xf32>
    %15 = arith.addf %13, %14 : vector<8x32xf32>
    %c0_5 = arith.constant 0 : index
    %c0_6 = arith.constant 0 : index
    %16 = vector.load %arg3[%c0_5, %c0_6] : memref<32x32xf32, #tpu.memory_space<vmem>>, vector<32x32xf32>
    %cst_7 = arith.constant dense<0.000000e+00> : vector<8x32xf32>
    %17 = tpu.matmul %0, %16, %cst_7 {dimension_numbers = #tpu.dot_dimension_numbers<[1], [0], [0], [1], [0, 0, 1, 1], [], []>} : vector<8x32xf32>, vector<32x32xf32>, vector<8x32xf32> -> vector<8x32xf32>
    %18 = vector.broadcast %3 : vector<1x32xf32> to vector<8x32xf32>
    %19 = arith.addf %17, %18 : vector<8x32xf32>
    %c0_8 = arith.constant 0 : index
    %c0_9 = arith.constant 0 : index
    %20 = vector.load %arg4[%c0_8, %c0_9] : memref<32x32xf32, #tpu.memory_space<vmem>>, vector<32x32xf32>
    %cst_10 = arith.constant dense<0.000000e+00> : vector<8x32xf32>
    %21 = tpu.matmul %0, %20, %cst_10 {dimension_numbers = #tpu.dot_dimension_numbers<[1], [0], [0], [1], [0, 0, 1, 1], [], []>} : vector<8x32xf32>, vector<32x32xf32>, vector<8x32xf32> -> vector<8x32xf32>
    %22 = vector.broadcast %4 : vector<1x32xf32> to vector<8x32xf32>
    %23 = arith.addf %21, %22 : vector<8x32xf32>
    %24 = vector.extract_strided_slice %15 {offsets = [0, 0], sizes = [8, 8], strides = [1, 1]} : vector<8x32xf32> to vector<8x8xf32>
    %25 = vector.extract_strided_slice %15 {offsets = [0, 8], sizes = [8, 8], strides = [1, 1]} : vector<8x32xf32> to vector<8x8xf32>
    %26 = vector.extract_strided_slice %15 {offsets = [0, 16], sizes = [8, 8], strides = [1, 1]} : vector<8x32xf32> to vector<8x8xf32>
    %27 = vector.extract_strided_slice %15 {offsets = [0, 24], sizes = [8, 8], strides = [1, 1]} : vector<8x32xf32> to vector<8x8xf32>
    %28 = vector.shape_cast %24 : vector<8x8xf32> to vector<1x8x8xf32>
    %29 = vector.shape_cast %25 : vector<8x8xf32> to vector<1x8x8xf32>
    %30 = vector.shape_cast %26 : vector<8x8xf32> to vector<1x8x8xf32>
    %31 = vector.shape_cast %27 : vector<8x8xf32> to vector<1x8x8xf32>
    %32 = tpu.concatenate %28, %29, %30, %31 in 0 : vector<1x8x8xf32>, vector<1x8x8xf32>, vector<1x8x8xf32>, vector<1x8x8xf32> -> vector<4x8x8xf32>
    %33 = vector.extract_strided_slice %19 {offsets = [0, 0], sizes = [8, 8], strides = [1, 1]} : vector<8x32xf32> to vector<8x8xf32>
    %34 = vector.extract_strided_slice %19 {offsets = [0, 8], sizes = [8, 8], strides = [1, 1]} : vector<8x32xf32> to vector<8x8xf32>
    %35 = vector.extract_strided_slice %19 {offsets = [0, 16], sizes = [8, 8], strides = [1, 1]} : vector<8x32xf32> to vector<8x8xf32>
    %36 = vector.extract_strided_slice %19 {offsets = [0, 24], sizes = [8, 8], strides = [1, 1]} : vector<8x32xf32> to vector<8x8xf32>
    %37 = vector.shape_cast %33 : vector<8x8xf32> to vector<1x8x8xf32>
    %38 = vector.shape_cast %34 : vector<8x8xf32> to vector<1x8x8xf32>
    %39 = vector.shape_cast %35 : vector<8x8xf32> to vector<1x8x8xf32>
    %40 = vector.shape_cast %36 : vector<8x8xf32> to vector<1x8x8xf32>
    %41 = tpu.concatenate %37, %38, %39, %40 in 0 : vector<1x8x8xf32>, vector<1x8x8xf32>, vector<1x8x8xf32>, vector<1x8x8xf32> -> vector<4x8x8xf32>
    %42 = vector.extract_strided_slice %23 {offsets = [0, 0], sizes = [8, 8], strides = [1, 1]} : vector<8x32xf32> to vector<8x8xf32>
    %43 = vector.extract_strided_slice %23 {offsets = [0, 8], sizes = [8, 8], strides = [1, 1]} : vector<8x32xf32> to vector<8x8xf32>
    %44 = vector.extract_strided_slice %23 {offsets = [0, 16], sizes = [8, 8], strides = [1, 1]} : vector<8x32xf32> to vector<8x8xf32>
    %45 = vector.extract_strided_slice %23 {offsets = [0, 24], sizes = [8, 8], strides = [1, 1]} : vector<8x32xf32> to vector<8x8xf32>
    %46 = vector.shape_cast %42 : vector<8x8xf32> to vector<1x8x8xf32>
    %47 = vector.shape_cast %43 : vector<8x8xf32> to vector<1x8x8xf32>
    %48 = vector.shape_cast %44 : vector<8x8xf32> to vector<1x8x8xf32>
    %49 = vector.shape_cast %45 : vector<8x8xf32> to vector<1x8x8xf32>
    %50 = tpu.concatenate %46, %47, %48, %49 in 0 : vector<1x8x8xf32>, vector<1x8x8xf32>, vector<1x8x8xf32>, vector<1x8x8xf32> -> vector<4x8x8xf32>
    "tpu.trace_start"() <{level = 10 : i32, message = "hqd,hkd->hqk"}> : () -> ()
    %cst_11 = arith.constant dense<0.000000e+00> : vector<4x8x8xf32>
    %51 = tpu.matmul %32, %41, %cst_11 {dimension_numbers = #tpu.dot_dimension_numbers<[2], [2], [1], [1], [0, 0, 0, 1, 1, 1], [0], [0]>} : vector<4x8x8xf32>, vector<4x8x8xf32>, vector<4x8x8xf32> -> vector<4x8x8xf32>
    "tpu.trace_stop"() : () -> ()
    %cst_12 = arith.constant dense<0xFF800000> : vector<4x8xf32>
    %52 = vector.multi_reduction <maximumf>, %51, %cst_12 [2] : vector<4x8x8xf32> to vector<4x8xf32>
    %53 = vector.shape_cast %52 : vector<4x8xf32> to vector<4x8x1xf32>
    %54 = vector.broadcast %53 : vector<4x8x1xf32> to vector<4x8x8xf32>
    %55 = arith.subf %51, %54 : vector<4x8x8xf32>
    %56 = math.exp %55 : vector<4x8x8xf32>
    %cst_13 = arith.constant dense<0.000000e+00> : vector<4x8xf32>
    %57 = vector.multi_reduction <add>, %56, %cst_13 [2] : vector<4x8x8xf32> to vector<4x8xf32>
    %58 = vector.shape_cast %57 : vector<4x8xf32> to vector<4x8x1xf32>
    %59 = tpu.reciprocal %58 : vector<4x8x1xf32> -> vector<4x8x1xf32>
    %60 = vector.broadcast %59 : vector<4x8x1xf32> to vector<4x8x8xf32>
    %61 = arith.mulf %56, %60 : vector<4x8x8xf32>
    "tpu.trace_start"() <{level = 10 : i32, message = "hqk,hkd->hqd"}> : () -> ()
    %cst_14 = arith.constant dense<0.000000e+00> : vector<4x8x8xf32>
    %62 = tpu.matmul %61, %50, %cst_14 {dimension_numbers = #tpu.dot_dimension_numbers<[2], [1], [1], [2], [0, 0, 0, 1, 1, 2], [0], [0]>} : vector<4x8x8xf32>, vector<4x8x8xf32>, vector<4x8x8xf32> -> vector<4x8x8xf32>
    "tpu.trace_stop"() : () -> ()
    %63 = vector.extract_strided_slice %62 {offsets = [0, 0, 0], sizes = [1, 8, 8], strides = [1, 1, 1]} : vector<4x8x8xf32> to vector<1x8x8xf32>
    %64 = vector.shape_cast %63 : vector<1x8x8xf32> to vector<8x8xf32>
    %65 = vector.extract_strided_slice %62 {offsets = [1, 0, 0], sizes = [1, 8, 8], strides = [1, 1, 1]} : vector<4x8x8xf32> to vector<1x8x8xf32>
    %66 = vector.shape_cast %65 : vector<1x8x8xf32> to vector<8x8xf32>
    %67 = vector.extract_strided_slice %62 {offsets = [2, 0, 0], sizes = [1, 8, 8], strides = [1, 1, 1]} : vector<4x8x8xf32> to vector<1x8x8xf32>
    %68 = vector.shape_cast %67 : vector<1x8x8xf32> to vector<8x8xf32>
    %69 = vector.extract_strided_slice %62 {offsets = [3, 0, 0], sizes = [1, 8, 8], strides = [1, 1, 1]} : vector<4x8x8xf32> to vector<1x8x8xf32>
    %70 = vector.shape_cast %69 : vector<1x8x8xf32> to vector<8x8xf32>
    %71 = tpu.concatenate %64, %66, %68, %70 in 1 : vector<8x8xf32>, vector<8x8xf32>, vector<8x8xf32>, vector<8x8xf32> -> vector<8x32xf32>
    %c0_15 = arith.constant 0 : index
    %c0_16 = arith.constant 0 : index
    %72 = vector.load %arg5[%c0_15, %c0_16] : memref<32x32xf32, #tpu.memory_space<vmem>>, vector<32x32xf32>
    %cst_17 = arith.constant dense<0.000000e+00> : vector<8x32xf32>
    %73 = tpu.matmul %71, %72, %cst_17 {dimension_numbers = #tpu.dot_dimension_numbers<[1], [0], [0], [1], [0, 0, 1, 1], [], []>} : vector<8x32xf32>, vector<32x32xf32>, vector<8x32xf32> -> vector<8x32xf32>
    %74 = vector.broadcast %5 : vector<1x32xf32> to vector<8x32xf32>
    %75 = arith.addf %73, %74 : vector<8x32xf32>
    %76 = arith.addf %0, %75 : vector<8x32xf32>
    %cst_18 = arith.constant dense<0.000000e+00> : vector<8xf32>
    %77 = vector.multi_reduction <add>, %76, %cst_18 [1] : vector<8x32xf32> to vector<8xf32>
    %78 = vector.shape_cast %77 : vector<8xf32> to vector<8x1xf32>
    %cst_19 = arith.constant 3.200000e+01 : f32
    %79 = vector.broadcast %cst_19 : f32 to vector<8x1xf32>
    %80 = arith.divf %78, %79 : vector<8x1xf32>
    %81 = vector.broadcast %80 : vector<8x1xf32> to vector<8x32xf32>
    %82 = arith.subf %76, %81 : vector<8x32xf32>
    %83 = arith.mulf %82, %82 : vector<8x32xf32>
    %cst_20 = arith.constant dense<0.000000e+00> : vector<8xf32>
    %84 = vector.multi_reduction <add>, %83, %cst_20 [1] : vector<8x32xf32> to vector<8xf32>
    %85 = vector.shape_cast %84 : vector<8xf32> to vector<8x1xf32>
    %cst_21 = arith.constant 3.200000e+01 : f32
    %86 = vector.broadcast %cst_21 : f32 to vector<8x1xf32>
    %87 = arith.divf %85, %86 : vector<8x1xf32>
    %88 = vector.broadcast %80 : vector<8x1xf32> to vector<8x32xf32>
    %89 = arith.subf %76, %88 : vector<8x32xf32>
    %cst_22 = arith.constant 9.99999974E-6 : f32
    %90 = vector.broadcast %cst_22 : f32 to vector<8x1xf32>
    %91 = arith.addf %87, %90 : vector<8x1xf32>
    %92 = math.rsqrt %91 : vector<8x1xf32>
    %93 = vector.broadcast %92 : vector<8x1xf32> to vector<8x32xf32>
    %94 = arith.mulf %89, %93 : vector<8x32xf32>
    %95 = vector.broadcast %6 : vector<1x32xf32> to vector<8x32xf32>
    %96 = arith.mulf %94, %95 : vector<8x32xf32>
    %97 = vector.broadcast %7 : vector<1x32xf32> to vector<8x32xf32>
    %98 = arith.addf %96, %97 : vector<8x32xf32>
    %c0_23 = arith.constant 0 : index
    %c0_24 = arith.constant 0 : index
    %99 = vector.load %arg6[%c0_23, %c0_24] : memref<32x64xf32, #tpu.memory_space<vmem>>, vector<32x64xf32>
    %cst_25 = arith.constant dense<0.000000e+00> : vector<8x64xf32>
    %100 = tpu.matmul %98, %99, %cst_25 {dimension_numbers = #tpu.dot_dimension_numbers<[1], [0], [0], [1], [0, 0, 1, 1], [], []>} : vector<8x32xf32>, vector<32x64xf32>, vector<8x64xf32> -> vector<8x64xf32>
    %101 = vector.broadcast %8 : vector<1x64xf32> to vector<8x64xf32>
    %102 = arith.addf %100, %101 : vector<8x64xf32>
    %cst_26 = arith.constant 0.000000e+00 : f32
    %103 = vector.broadcast %cst_26 : f32 to vector<8x64xf32>
    %104 = arith.maximumf %102, %103 : vector<8x64xf32>
    %c0_27 = arith.constant 0 : index
    %c0_28 = arith.constant 0 : index
    %105 = vector.load %arg7[%c0_27, %c0_28] : memref<64x32xf32, #tpu.memory_space<vmem>>, vector<64x32xf32>
    %cst_29 = arith.constant dense<0.000000e+00> : vector<8x32xf32>
    %106 = tpu.matmul %104, %105, %cst_29 {dimension_numbers = #tpu.dot_dimension_numbers<[1], [0], [0], [1], [0, 0, 1, 1], [], []>} : vector<8x64xf32>, vector<64x32xf32>, vector<8x32xf32> -> vector<8x32xf32>
    %107 = vector.broadcast %9 : vector<1x32xf32> to vector<8x32xf32>
    %108 = arith.addf %106, %107 : vector<8x32xf32>
    %109 = arith.addf %108, %98 : vector<8x32xf32>
    %cst_30 = arith.constant dense<0.000000e+00> : vector<8xf32>
    %110 = vector.multi_reduction <add>, %109, %cst_30 [1] : vector<8x32xf32> to vector<8xf32>
    %111 = vector.shape_cast %110 : vector<8xf32> to vector<8x1xf32>
    %cst_31 = arith.constant 3.200000e+01 : f32
    %112 = vector.broadcast %cst_31 : f32 to vector<8x1xf32>
    %113 = arith.divf %111, %112 : vector<8x1xf32>
    %114 = vector.broadcast %113 : vector<8x1xf32> to vector<8x32xf32>
    %115 = arith.subf %109, %114 : vector<8x32xf32>
    %116 = arith.mulf %115, %115 : vector<8x32xf32>
    %cst_32 = arith.constant dense<0.000000e+00> : vector<8xf32>
    %117 = vector.multi_reduction <add>, %116, %cst_32 [1] : vector<8x32xf32> to vector<8xf32>
    %118 = vector.shape_cast %117 : vector<8xf32> to vector<8x1xf32>
    %cst_33 = arith.constant 3.200000e+01 : f32
    %119 = vector.broadcast %cst_33 : f32 to vector<8x1xf32>
    %120 = arith.divf %118, %119 : vector<8x1xf32>
    %121 = vector.broadcast %113 : vector<8x1xf32> to vector<8x32xf32>
    %122 = arith.subf %109, %121 : vector<8x32xf32>
    %cst_34 = arith.constant 9.99999974E-6 : f32
    %123 = vector.broadcast %cst_34 : f32 to vector<8x1xf32>
    %124 = arith.addf %120, %123 : vector<8x1xf32>
    %125 = math.rsqrt %124 : vector<8x1xf32>
    %126 = vector.broadcast %125 : vector<8x1xf32> to vector<8x32xf32>
    %127 = arith.mulf %122, %126 : vector<8x32xf32>
    %128 = vector.broadcast %10 : vector<1x32xf32> to vector<8x32xf32>
    %129 = arith.mulf %127, %128 : vector<8x32xf32>
    %130 = vector.broadcast %11 : vector<1x32xf32> to vector<8x32xf32>
    %131 = arith.addf %129, %130 : vector<8x32xf32>
    %c0_35 = arith.constant 0 : index
    %c0_36 = arith.constant 0 : index
    %132 = vector.load %arg9[%c0_35, %c0_36] : memref<8x32xf32, #tpu.memory_space<vmem>>, vector<8x32xf32>
    tpu.vector_store %arg9[%c0_35, %c0_36], %131 {strides = array<i32>} : memref<8x32xf32, #tpu.memory_space<vmem>>, vector<8x32xf32>,
    return
  }
  func.func @transform_0(%arg0: i32) -> (i32, i32) {
    %c0_i32 = arith.constant 0 : i32
    %c0_i32_0 = arith.constant 0 : i32
    return %arg0, %c0_i32 : i32, i32
  }
  func.func @transform_1(%arg0: i32) -> (i32, i32) {
    %c0_i32 = arith.constant 0 : i32
    %c0_i32_0 = arith.constant 0 : i32
    %c0_i32_1 = arith.constant 0 : i32
    return %c0_i32, %c0_i32_0 : i32, i32
  }
  func.func @transform_2(%arg0: i32) -> (i32, i32) {
    %c0_i32 = arith.constant 0 : i32
    %c0_i32_0 = arith.constant 0 : i32
    %c0_i32_1 = arith.constant 0 : i32
    return %c0_i32, %c0_i32_0 : i32, i32
  }
  func.func @transform_3(%arg0: i32) -> (i32, i32) {
    %c0_i32 = arith.constant 0 : i32
    %c0_i32_0 = arith.constant 0 : i32
    %c0_i32_1 = arith.constant 0 : i32
    return %c0_i32, %c0_i32_0 : i32, i32
  }
  func.func @transform_4(%arg0: i32) -> (i32, i32) {
    %c0_i32 = arith.constant 0 : i32
    %c0_i32_0 = arith.constant 0 : i32
    %c0_i32_1 = arith.constant 0 : i32
    return %c0_i32, %c0_i32_0 : i32, i32
  }
  func.func @transform_5(%arg0: i32) -> (i32, i32) {
    %c0_i32 = arith.constant 0 : i32
    %c0_i32_0 = arith.constant 0 : i32
    %c0_i32_1 = arith.constant 0 : i32
    return %c0_i32, %c0_i32_0 : i32, i32
  }
  func.func @transform_6(%arg0: i32) -> (i32, i32) {
    %c0_i32 = arith.constant 0 : i32
    %c0_i32_0 = arith.constant 0 : i32
    %c0_i32_1 = arith.constant 0 : i32
    return %c0_i32, %c0_i32_0 : i32, i32
  }
  func.func @transform_7(%arg0: i32) -> (i32, i32) {
    %c0_i32 = arith.constant 0 : i32
    %c0_i32_0 = arith.constant 0 : i32
    %c0_i32_1 = arith.constant 0 : i32
    return %c0_i32, %c0_i32_0 : i32, i32
  }
  func.func @transform_8(%arg0: i32) -> (i32, i32) {
    %c0_i32 = arith.constant 0 : i32
    %c0_i32_0 = arith.constant 0 : i32
    return %arg0, %c0_i32 : i32, i32
  }
}

</mosaic_0001>

<llo_original>
// kernel: encoder_block.1
$region0: #{encoder_block.1}
  #allocation0 [shape = 'u32[]', space=smem, size = 0x4, offset = 0x4, fixed_abs, tag = 'smem constant byte address 0x4 - core index']
  #allocation1 [shape = 'u32[144,128]{1,0:T(1,128)}', space=vmem, size = 0x12000, scoped, tag = 'internal scratch']
  %s0 = inlined_call_operand.vmem [shape: f32[16,32], index: 0, kind: input, shape index: {}]
  %s1 = inlined_call_operand.vmem [shape: f32[32,32], index: 1, kind: input, shape index: {}]
  %s2 = inlined_call_operand.vmem [shape: f32[32,32], index: 2, kind: input, shape index: {}]
  %s3 = inlined_call_operand.vmem [shape: f32[32,32], index: 3, kind: input, shape index: {}]
  %s4 = inlined_call_operand.vmem [shape: f32[32,32], index: 4, kind: input, shape index: {}]
  %s5 = inlined_call_operand.vmem [shape: f32[32,64], index: 5, kind: input, shape index: {}]
  %s6 = inlined_call_operand.vmem [shape: f32[64,32], index: 6, kind: input, shape index: {}]
  %s7 = inlined_call_operand.vmem [shape: f32[10,64], index: 7, kind: input, shape index: {}]
  %s8 = inlined_call_operand.hbm [shape: f32[16,32], index: 8, kind: output, shape index: {}]
  %s9 = sld [smem:[#allocation0]]
  $region65: #{encoder_block.1} parent=0
    _
  %s11 = ssub.s32 1, %s9
  %s12 = scalar_select 0, %s11, %s9
  $region1: #{encoder_block.1} parent=0
    #allocation2 [shape = 'u8[8192]{0}', space=vmem, size = 0x2000, scoped, tag = 'output window, operand 0']
    #allocation3 [shape = 's32[2]{0}', space=sflag, size = 0x8, scoped, tag = 'scoped memory for encoder_block.1']
    %13 = vsyncpa [#allocation3], 0
    %s14 = scalar_lea.sflag [#allocation3], 1
    %15 = vsyncpa %s14, 0
    loop: start=0, step=1, limit=4
    $region2: #{encoder_block.1} parent=1 // loop_pre_header
      _
    $region3: #{encoder_block.1} parent=1 // loop_header
      %s17 = sphi 0, %s21
      %p18 = scmp.ge.s32.totalorder %s17, 4
      %s27 = sphi 0, %s29
      %s30 = sphi 0, %s27
      %s31 = sphi 0, %s30
      %s47 = sphi 0, %s31
      %s51 = sphi 0, %s51
      %s53 = sphi 0, %s51
      %s54 = sphi 0, %s53
      %s68 = sphi 0, %s54
      %s72 = sphi 0, %s72
      %s74 = sphi 0, %s72
      %s75 = sphi 0, %s74
      %s89 = sphi 0, %s75
      %s93 = sphi 0, %s93
      %s95 = sphi 0, %s93
      %s96 = sphi 0, %s95
      %s110 = sphi 0, %s96
      %s114 = sphi 0, %s114
      %s116 = sphi 0, %s114
      %s117 = sphi 0, %s116
      %s131 = sphi 0, %s117
      %s135 = sphi 0, %s135
      %s137 = sphi 0, %s135
      %s138 = sphi 0, %s137
      %s152 = sphi 0, %s138
      %s156 = sphi 0, %s156
      %s158 = sphi 0, %s156
      %s159 = sphi 0, %s158
      %s173 = sphi 0, %s159
      %s177 = sphi 0, %s177
      %s179 = sphi 0, %s177
      %s180 = sphi 0, %s179
      %s194 = sphi 0, %s180
      %s200 = sphi 0, %s202
      %s203 = sphi 0, %s200
      %s204 = sphi 0, %s203
      %s220 = sphi 0, %s204
    $region4: #{encoder_block.1} parent=1 // loop_header_branch
      %20 = sbr.rel (%p18) target = $region8
    $region5: #{encoder_block.1} parent=1 // loop_body
      %s22 = ssub.s32 %s17, 1
      %s23 = ssub.s32 %s17, 2
      %s24 = sadd.s32 %s17, 1
      %s25 = ssub.s32 %s17, %s24
      %p26 = scmp.eq.s32.totalorder %s25, 0
      %s28 = sadd.s32 %s27, 1
      %s29 = scalar_select %p26, %s27, %s28
      %p32 = pneg %p26
      %p33 = scmp.eq.s32.totalorder %s17, 1
      %p34 = por %p32, %p33
      %p35 = scmp.ne.s32.totalorder %s27, %s30
      %p36 = scmp.eq.s32.totalorder %s17, 0
      %p37 = por %p35, %p36
      %p38 = scmp.ne.s32.totalorder %s27, %s30
      %p39 = scmp.eq.s32.totalorder %s22, 1
      %p40 = por %p38, %p39
      %p41 = scmp.ne.s32.totalorder %s30, %s31
      %p42 = scmp.eq.s32.totalorder %s22, 0
      %p43 = por %p41, %p42
      %p44 = scmp.ne.s32.totalorder %s30, %s31
      %p45 = scmp.eq.s32.totalorder %s23, 1
      %p46 = por %p44, %p45
      %p48 = scmp.ne.s32.totalorder %s31, %s47
      %p49 = scmp.eq.s32.totalorder %s23, 0
      %p50 = por %p48, %p49
      %s52 = sadd.s32 %s51, 1
      %p55 = scmp.eq.s32.totalorder %s17, 1
      %p56 = scmp.ne.s32.totalorder %s51, %s53
      %p57 = scmp.eq.s32.totalorder %s17, 0
      %p58 = por %p56, %p57
      %p59 = scmp.ne.s32.totalorder %s51, %s53
      %p60 = scmp.eq.s32.totalorder %s22, 1
      %p61 = por %p59, %p60
      %p62 = scmp.ne.s32.totalorder %s53, %s54
      %p63 = scmp.eq.s32.totalorder %s22, 0
      %p64 = por %p62, %p63
      %p65 = scmp.ne.s32.totalorder %s53, %s54
      %p66 = scmp.eq.s32.totalorder %s23, 1
      %p67 = por %p65, %p66
      %p69 = scmp.ne.s32.totalorder %s54, %s68
      %p70 = scmp.eq.s32.totalorder %s23, 0
      %p71 = por %p69, %p70
      %s73 = sadd.s32 %s72, 1
      %p76 = scmp.eq.s32.totalorder %s17, 1
      %p77 = scmp.ne.s32.totalorder %s72, %s74
      %p78 = scmp.eq.s32.totalorder %s17, 0
      %p79 = por %p77, %p78
      %p80 = scmp.ne.s32.totalorder %s72, %s74
      %p81 = scmp.eq.s32.totalorder %s22, 1
      %p82 = por %p80, %p81
      %p83 = scmp.ne.s32.totalorder %s74, %s75
      %p84 = scmp.eq.s32.totalorder %s22, 0
      %p85 = por %p83, %p84
      %p86 = scmp.ne.s32.totalorder %s74, %s75
      %p87 = scmp.eq.s32.totalorder %s23, 1
      %p88 = por %p86, %p87
      %p90 = scmp.ne.s32.totalorder %s75, %s89
      %p91 = scmp.eq.s32.totalorder %s23, 0
      %p92 = por %p90, %p91
      %s94 = sadd.s32 %s93, 1
      %p97 = scmp.eq.s32.totalorder %s17, 1
      %p98 = scmp.ne.s32.totalorder %s93, %s95
      %p99 = scmp.eq.s32.totalorder %s17, 0
      %p100 = por %p98, %p99
      %p101 = scmp.ne.s32.totalorder %s93, %s95
      %p102 = scmp.eq.s32.totalorder %s22, 1
      %p103 = por %p101, %p102
      %p104 = scmp.ne.s32.totalorder %s95, %s96
      %p105 = scmp.eq.s32.totalorder %s22, 0
      %p106 = por %p104, %p105
      %p107 = scmp.ne.s32.totalorder %s95, %s96
      %p108 = scmp.eq.s32.totalorder %s23, 1
      %p109 = por %p107, %p108
      %p111 = scmp.ne.s32.totalorder %s96, %s110
      %p112 = scmp.eq.s32.totalorder %s23, 0
      %p113 = por %p111, %p112
      %s115 = sadd.s32 %s114, 1
      %p118 = scmp.eq.s32.totalorder %s17, 1
      %p119 = scmp.ne.s32.totalorder %s114, %s116
      %p120 = scmp.eq.s32.totalorder %s17, 0
      %p121 = por %p119, %p120
      %p122 = scmp.ne.s32.totalorder %s114, %s116
      %p123 = scmp.eq.s32.totalorder %s22, 1
      %p124 = por %p122, %p123
      %p125 = scmp.ne.s32.totalorder %s116, %s117
      %p126 = scmp.eq.s32.totalorder %s22, 0
      %p127 = por %p125, %p126
      %p128 = scmp.ne.s32.totalorder %s116, %s117
      %p129 = scmp.eq.s32.totalorder %s23, 1
      %p130 = por %p128, %p129
      %p132 = scmp.ne.s32.totalorder %s117, %s131
      %p133 = scmp.eq.s32.totalorder %s23, 0
      %p134 = por %p132, %p133
      %s136 = sadd.s32 %s135, 1
      %p139 = scmp.eq.s32.totalorder %s17, 1
      %p140 = scmp.ne.s32.totalorder %s135, %s137
      %p141 = scmp.eq.s32.totalorder %s17, 0
      %p142 = por %p140, %p141
      %p143 = scmp.ne.s32.totalorder %s135, %s137
      %p144 = scmp.eq.s32.totalorder %s22, 1
      %p145 = por %p143, %p144
      %p146 = scmp.ne.s32.totalorder %s137, %s138
      %p147 = scmp.eq.s32.totalorder %s22, 0
      %p148 = por %p146, %p147
      %p149 = scmp.ne.s32.totalorder %s137, %s138
      %p150 = scmp.eq.s32.totalorder %s23, 1
      %p151 = por %p149, %p150
      %p153 = scmp.ne.s32.totalorder %s138, %s152
      %p154 = scmp.eq.s32.totalorder %s23, 0
      %p155 = por %p153, %p154
      %s157 = sadd.s32 %s156, 1
      %p160 = scmp.eq.s32.totalorder %s17, 1
      %p161 = scmp.ne.s32.totalorder %s156, %s158
      %p162 = scmp.eq.s32.totalorder %s17, 0
      %p163 = por %p161, %p162
      %p164 = scmp.ne.s32.totalorder %s156, %s158
      %p165 = scmp.eq.s32.totalorder %s22, 1
      %p166 = por %p164, %p165
      %p167 = scmp.ne.s32.totalorder %s158, %s159
      %p168 = scmp.eq.s32.totalorder %s22, 0
      %p169 = por %p167, %p168
      %p170 = scmp.ne.s32.totalorder %s158, %s159
      %p171 = scmp.eq.s32.totalorder %s23, 1
      %p172 = por %p170, %p171
      %p174 = scmp.ne.s32.totalorder %s159, %s173
      %p175 = scmp.eq.s32.totalorder %s23, 0
      %p176 = por %p174, %p175
      %s178 = sadd.s32 %s177, 1
      %p181 = scmp.eq.s32.totalorder %s17, 1
      %p182 = scmp.ne.s32.totalorder %s177, %s179
      %p183 = scmp.eq.s32.totalorder %s17, 0
      %p184 = por %p182, %p183
      %p185 = scmp.ne.s32.totalorder %s177, %s179
      %p186 = scmp.eq.s32.totalorder %s22, 1
      %p187 = por %p185, %p186
      %p188 = scmp.ne.s32.totalorder %s179, %s180
      %p189 = scmp.eq.s32.totalorder %s22, 0
      %p190 = por %p188, %p189
      %p191 = scmp.ne.s32.totalorder %s179, %s180
      %p192 = scmp.eq.s32.totalorder %s23, 1
      %p193 = por %p191, %p192
      %p195 = scmp.ne.s32.totalorder %s180, %s194
      %p196 = scmp.eq.s32.totalorder %s23, 0
      %p197 = por %p195, %p196
      %s198 = ssub.s32 %s17, %s24
      %p199 = scmp.eq.s32.totalorder %s198, 0
      %s201 = sadd.s32 %s200, 1
      %s202 = scalar_select %p199, %s200, %s201
      %p205 = pneg %p199
      %p206 = scmp.eq.s32.totalorder %s17, 1
      %p207 = por %p205, %p206
      %p208 = scmp.ne.s32.totalorder %s200, %s203
      %p209 = scmp.eq.s32.totalorder %s17, 0
      %p210 = por %p208, %p209
      %p211 = scmp.ne.s32.totalorder %s200, %s203
      %p212 = scmp.eq.s32.totalorder %s22, 1
      %p213 = por %p211, %p212
      %p214 = scmp.ne.s32.totalorder %s203, %s204
      %p215 = scmp.eq.s32.totalorder %s22, 0
      %p216 = por %p214, %p215
      %p217 = scmp.ne.s32.totalorder %s203, %s204
      %p218 = scmp.eq.s32.totalorder %s23, 1
      %p219 = por %p217, %p218
      %p221 = scmp.ne.s32.totalorder %s204, %s220
      %p222 = scmp.eq.s32.totalorder %s23, 0
      %p223 = por %p221, %p222
      %p224 = scmp.le.s32.totalorder 1, %s17
      %p225 = scmp.lt.s32.totalorder %s17, 3
      %p226 = pnand %p224, %p225
      %p227 = pneg %p226
      // Predicated region
      $region9: #{encoder_block.1} parent=5 // pred_check
        _
      $region10: #{encoder_block.1} parent=5 // pred_check_branch
        %229 = sbr.rel (%p226) target = $region12
      $region11: #{encoder_block.1} parent=5 // pred_region
        %s230 = ssub.s32 %s17, 1
        // Predicated region
        $region13: #{encoder_block.1} parent=11 // pred_check
          %p231 = pneg %p64
        $region14: #{encoder_block.1} parent=11 // pred_check_branch
          %233 = sbr.rel (%p231) target = $region16
        $region15: #{encoder_block.1} parent=11 // pred_region
          _
        $region16: #{encoder_block.1} parent=11 // pred_fallthru
          _
        // Predicated region
        $region17: #{encoder_block.1} parent=11 // pred_check
          %p234 = pneg %p85
        $region18: #{encoder_block.1} parent=11 // pred_check_branch
          %236 = sbr.rel (%p234) target = $region20
        $region19: #{encoder_block.1} parent=11 // pred_region
          _
        $region20: #{encoder_block.1} parent=11 // pred_fallthru
          _
        // Predicated region
        $region21: #{encoder_block.1} parent=11 // pred_check
          %p237 = pneg %p106
        $region22: #{encoder_block.1} parent=11 // pred_check_branch
          %239 = sbr.rel (%p237) target = $region24
        $region23: #{encoder_block.1} parent=11 // pred_region
          _
        $region24: #{encoder_block.1} parent=11 // pred_fallthru
          _
        // Predicated region
        $region25: #{encoder_block.1} parent=11 // pred_check
          %p240 = pneg %p127
        $region26: #{encoder_block.1} parent=11 // pred_check_branch
          %242 = sbr.rel (%p240) target = $region28
        $region27: #{encoder_block.1} parent=11 // pred_region
          _
        $region28: #{encoder_block.1} parent=11 // pred_fallthru
          _
        // Predicated region
        $region29: #{encoder_block.1} parent=11 // pred_check
          %p243 = pneg %p148
        $region30: #{encoder_block.1} parent=11 // pred_check_branch
          %245 = sbr.rel (%p243) target = $region32
        $region31: #{encoder_block.1} parent=11 // pred_region
          _
        $region32: #{encoder_block.1} parent=11 // pred_fallthru
          _
        // Predicated region
        $region33: #{encoder_block.1} parent=11 // pred_check
          %p246 = pneg %p169
        $region34: #{encoder_block.1} parent=11 // pred_check_branch
          %248 = sbr.rel (%p246) target = $region36
        $region35: #{encoder_block.1} parent=11 // pred_region
          _
        $region36: #{encoder_block.1} parent=11 // pred_fallthru
          _
        // Predicated region
        $region37: #{encoder_block.1} parent=11 // pred_check
          %p249 = pneg %p190
        $region38: #{encoder_block.1} parent=11 // pred_check_branch
          %251 = sbr.rel (%p249) target = $region40
        $region39: #{encoder_block.1} parent=11 // pred_region
          _
        $region40: #{encoder_block.1} parent=11 // pred_fallthru
          _
      $region12: #{encoder_block.1} parent=5 // pred_fallthru
        _
      %p252 = scmp.lt.s32.totalorder %s17, 2
      // Predicated region
      $region41: #{encoder_block.1} parent=5 // pred_check
        %p253 = pneg %p252
      $region42: #{encoder_block.1} parent=5 // pred_check_branch
        %255 = sbr.rel (%p253) target = $region44
      $region43: #{encoder_block.1} parent=5 // pred_region
        // Predicated region
        $region45: #{encoder_block.1} parent=43 // pred_check
          %p256 = pneg %p37
        $region46: #{encoder_block.1} parent=43 // pred_check_branch
          %258 = sbr.rel (%p256) target = $region48
        $region47: #{encoder_block.1} parent=43 // pred_region
          %p259 = scmp.lt.s32.totalorder %s17, 1
          %s260 = scalar_select %p259, %s17, 1
          %s261 = smul.addr %s260, 8
          %s262 = scalar_lea.vmem %s0, %s261
        $region48: #{encoder_block.1} parent=43 // pred_fallthru
          _
      $region44: #{encoder_block.1} parent=5 // pred_fallthru
        _
      %p263 = scmp.le.s32.totalorder 1, %s17
      %p264 = scmp.lt.s32.totalorder %s17, 3
      %p265 = pnand %p263, %p264
      %p266 = pneg %p265
      // Predicated region
      $region49: #{encoder_block.1} parent=5 // pred_check
        _
      $region50: #{encoder_block.1} parent=5 // pred_check_branch
        %268 = sbr.rel (%p265) target = $region52
      $region51: #{encoder_block.1} parent=5 // pred_region
        %s269 = ssub.s32 %s17, 1
        %p270 = scmp.lt.s32.totalorder %s22, 1
        %s271 = scalar_select %p270, %s22, 1
        %s272 = smul.addr %s271, 8
        %s273 = scalar_lea.vmem %s0, %s272
        %p274 = pneg %p43
        %p275 = pneg %p40
        %p276 = pneg %p64
        %p277 = pneg %p61
        %p278 = pneg %p85
        %p279 = pneg %p82
        %p280 = pneg %p106
        %p281 = pneg %p103
        %p282 = pneg %p127
        %p283 = pneg %p124
        %p284 = pneg %p148
        %p285 = pneg %p145
        %p286 = pneg %p169
        %p287 = pneg %p166
        %p288 = pneg %p190
        %p289 = pneg %p187
        %p290 = pneg %p216
        %p291 = pneg %p213
        %s292 = sand.u32 %s203, 1
        %s293 = scalar_lea.sflag [#allocation3], %s292
        %s294 = sand.u32 %s203, 1
        %s295 = smul.addr %s294, 8
        %s296 = scalar_lea.vmem [#allocation2], %s295
        %p297 = scmp.lt.s32.totalorder %s22, 1
        %s298 = scalar_select %p297, %s22, 1
        %s299 = smul.addr %s298, 8
        %s300 = scalar_lea.vmem %s0, %s299
        %v301 = vld [vmem:[%s300] sm:$0xff]
        %v302 = vld [vmem:[%s7] sm:$0xff]
        %v303 = vld [vmem:[%s7 + $0x8] sm:$0x3]
        %v304 = vld [vmem:[%s1] sm:$0xff]
        %v305 = vld [vmem:[%s1 + $0x8] sm:$0xff]
        %v306 = vld [vmem:[%s1 + $0x10] sm:$0xff]
        %v307 = vld [vmem:[%s1 + $0x18] sm:$0xff]
        %v308 = vlaneseq
        %v309 = vshrl.u32 %v308, 7
        %v310 = vsub.s32 0, %v309
        %v311 = vrot.slane %v302, %v310
        %vm312 = vcmask 261120
        %v314 = vsel %vm312, %v301, 0
        %316 = vmatprep.subr.mxu0 0.0
        %317 = vmatpush1.msra.mxu0 0.0
        %318 = vmatprep.subr.mxu0 0.0
        %319 = vmatpush1.msra.mxu0 0.0
        %320 = vmatprep.subr.mxu0 0.0
        %321 = vmatpush1.msra.mxu0 0.0
        %322 = vmatprep.subr.mxu0 0.0
        %323 = vmatpush1.msra.mxu0 0.0
        %324 = vmatprep.subr.mxu0 0.0
        %325 = vmatpush1.msra.mxu0 0.0
        %326 = vmatprep.subr.mxu0 0.0
        %327 = vmatpush1.msra.mxu0 0.0
        %328 = vmatprep.subr.mxu0 0.0
        %329 = vmatpush1.msra.mxu0 0.0
        %330 = vmatprep.subr.mxu0 0.0
        %331 = vmatpush1.msra.mxu0 0.0
        %332 = vmatprep.subr.mxu0 0.0
        %333 = vmatpush1.msra.mxu0 0.0
        %334 = vmatprep.subr.mxu0 0.0
        %335 = vmatpush1.msra.mxu0 0.0
        %336 = vmatprep.subr.mxu0 0.0
        %337 = vmatpush1.msra.mxu0 0.0
        %338 = vmatprep.subr.mxu0 0.0
        %339 = vmatpush1.msra.mxu0 0.0
        %340 = vmatprep.subr.mxu0 0.0
        %341 = vmatpush1.msra.mxu0 %v307
        %342 = vmatprep.subr.mxu0 0.0
        %343 = vmatpush1.msra.mxu0 %v306
        %344 = vmatprep.subr.mxu0 0.0
        %345 = vmatpush1.msra.mxu0 %v305
        %346 = vmatprep.subr.mxu0 0.0
        %347 = vmatpush1.msra.mxu0 %v304
        %348 = vmatprep.subr.mxu0 0.0
        %349 = vmatpush2.msra.mxu0 0.0
        %350 = vmatprep.subr.mxu0 0.0
        %351 = vmatpush2.msra.mxu0 0.0
        %352 = vmatprep.subr.mxu0 0.0
        %353 = vmatpush2.msra.mxu0 0.0
        %354 = vmatprep.subr.mxu0 0.0
        %355 = vmatpush2.msra.mxu0 0.0
        %356 = vmatprep.subr.mxu0 0.0
        %357 = vmatpush2.msra.mxu0 0.0
        %358 = vmatprep.subr.mxu0 0.0
        %359 = vmatpush2.msra.mxu0 0.0
        %360 = vmatprep.subr.mxu0 0.0
        %361 = vmatpush2.msra.mxu0 0.0
        %362 = vmatprep.subr.mxu0 0.0
        %363 = vmatpush2.msra.mxu0 0.0
        %364 = vmatprep.subr.mxu0 0.0
        %365 = vmatpush2.msra.mxu0 0.0
        %366 = vmatprep.subr.mxu0 0.0
        %367 = vmatpush2.msra.mxu0 0.0
        %368 = vmatprep.subr.mxu0 0.0
        %369 = vmatpush2.msra.mxu0 0.0
        %370 = vmatprep.subr.mxu0 0.0
        %371 = vmatpush2.msra.mxu0 0.0
        %372 = vmatprep.subr.mxu0 0.0
        %373 = vmatpush2.msra.mxu0 0.0
        %374 = vmatprep.subr.mxu0 0.0
        %375 = vmatpush2.msra.mxu0 0.0
        %376 = vmatprep.subr.mxu0 0.0
        %377 = vmatpush2.msra.mxu0 0.0
        %378 = vmatprep.subr.mxu0 0.0
        %379 = vmatpush2.msra.mxu0 0.0
        %380 = vmatprep.mubr.f32.mxu0 0.0
        %381 = vmatmul.mubr.f32.gmra.mxu0 %v314
        %v382 = vpop.f32.mrf.mxu0
        %v383 = vadd.f32 %v311, %v382
        %v384 = vpop.f32.mrf.mxu0
        %385 = vdwg.mxu0
        %v386 = vld [vmem:[%s2] sm:$0xff]
        %v387 = vld [vmem:[%s2 + $0x8] sm:$0xff]
        %v388 = vld [vmem:[%s2 + $0x10] sm:$0xff]
        %v389 = vld [vmem:[%s2 + $0x18] sm:$0xff]
        %v390 = vlaneseq
        %v391 = vshrl.u32 %v390, 7
        %v392 = vsub.s32 1, %v391
        %v393 = vrot.slane %v302, %v392
        %394 = vmatprep.subr.mxu0 0.0
        %395 = vmatpush1.msra.mxu0 0.0
        %396 = vmatprep.subr.mxu0 0.0
        %397 = vmatpush1.msra.mxu0 0.0
        %398 = vmatprep.subr.mxu0 0.0
        %399 = vmatpush1.msra.mxu0 0.0
        %400 = vmatprep.subr.mxu0 0.0
        %401 = vmatpush1.msra.mxu0 0.0
        %402 = vmatprep.subr.mxu0 0.0
        %403 = vmatpush1.msra.mxu0 0.0
        %404 = vmatprep.subr.mxu0 0.0
        %405 = vmatpush1.msra.mxu0 0.0
        %406 = vmatprep.subr.mxu0 0.0
        %407 = vmatpush1.msra.mxu0 0.0
        %408 = vmatprep.subr.mxu0 0.0
        %409 = vmatpush1.msra.mxu0 0.0
        %410 = vmatprep.subr.mxu0 0.0
        %411 = vmatpush1.msra.mxu0 0.0
        %412 = vmatprep.subr.mxu0 0.0
        %413 = vmatpush1.msra.mxu0 0.0
        %414 = vmatprep.subr.mxu0 0.0
        %415 = vmatpush1.msra.mxu0 0.0
        %416 = vmatprep.subr.mxu0 0.0
        %417 = vmatpush1.msra.mxu0 0.0
        %418 = vmatprep.subr.mxu0 0.0
        %419 = vmatpush1.msra.mxu0 %v389
        %420 = vmatprep.subr.mxu0 0.0
        %421 = vmatpush1.msra.mxu0 %v388
        %422 = vmatprep.subr.mxu0 0.0
        %423 = vmatpush1.msra.mxu0 %v387
        %424 = vmatprep.subr.mxu0 0.0
        %425 = vmatpush1.msra.mxu0 %v386
        %426 = vmatprep.subr.mxu0 0.0
        %427 = vmatpush2.msra.mxu0 0.0
        %428 = vmatprep.subr.mxu0 0.0
        %429 = vmatpush2.msra.mxu0 0.0
        %430 = vmatprep.subr.mxu0 0.0
        %431 = vmatpush2.msra.mxu0 0.0
        %432 = vmatprep.subr.mxu0 0.0
        %433 = vmatpush2.msra.mxu0 0.0
        %434 = vmatprep.subr.mxu0 0.0
        %435 = vmatpush2.msra.mxu0 0.0
        %436 = vmatprep.subr.mxu0 0.0
        %437 = vmatpush2.msra.mxu0 0.0
        %438 = vmatprep.subr.mxu0 0.0
        %439 = vmatpush2.msra.mxu0 0.0
        %440 = vmatprep.subr.mxu0 0.0
        %441 = vmatpush2.msra.mxu0 0.0
        %442 = vmatprep.subr.mxu0 0.0
        %443 = vmatpush2.msra.mxu0 0.0
        %444 = vmatprep.subr.mxu0 0.0
        %445 = vmatpush2.msra.mxu0 0.0
        %446 = vmatprep.subr.mxu0 0.0
        %447 = vmatpush2.msra.mxu0 0.0
        %448 = vmatprep.subr.mxu0 0.0
        %449 = vmatpush2.msra.mxu0 0.0
        %450 = vmatprep.subr.mxu0 0.0
        %451 = vmatpush2.msra.mxu0 0.0
        %452 = vmatprep.subr.mxu0 0.0
        %453 = vmatpush2.msra.mxu0 0.0
        %454 = vmatprep.subr.mxu0 0.0
        %455 = vmatpush2.msra.mxu0 0.0
        %456 = vmatprep.subr.mxu0 0.0
        %457 = vmatpush2.msra.mxu0 0.0
        %458 = vmatprep.mubr.f32.mxu0 0.0
        %459 = vmatmul.mubr.f32.gmra.mxu0 %v314
        %v460 = vpop.f32.mrf.mxu0
        %v461 = vadd.f32 %v393, %v460
        %v462 = vpop.f32.mrf.mxu0
        %463 = vdwg.mxu0
        %v464 = vld [vmem:[%s3] sm:$0xff]
        %v465 = vld [vmem:[%s3 + $0x8] sm:$0xff]
        %v466 = vld [vmem:[%s3 + $0x10] sm:$0xff]
        %v467 = vld [vmem:[%s3 + $0x18] sm:$0xff]
        %v468 = vlaneseq
        %v469 = vshrl.u32 %v468, 7
        %v470 = vsub.s32 2, %v469
        %v471 = vrot.slane %v302, %v470
        %472 = vmatprep.subr.mxu0 0.0
        %473 = vmatpush1.msra.mxu0 0.0
        %474 = vmatprep.subr.mxu0 0.0
        %475 = vmatpush1.msra.mxu0 0.0
        %476 = vmatprep.subr.mxu0 0.0
        %477 = vmatpush1.msra.mxu0 0.0
        %478 = vmatprep.subr.mxu0 0.0
        %479 = vmatpush1.msra.mxu0 0.0
        %480 = vmatprep.subr.mxu0 0.0
        %481 = vmatpush1.msra.mxu0 0.0
        %482 = vmatprep.subr.mxu0 0.0
        %483 = vmatpush1.msra.mxu0 0.0
        %484 = vmatprep.subr.mxu0 0.0
        %485 = vmatpush1.msra.mxu0 0.0
        %486 = vmatprep.subr.mxu0 0.0
        %487 = vmatpush1.msra.mxu0 0.0
        %488 = vmatprep.subr.mxu0 0.0
        %489 = vmatpush1.msra.mxu0 0.0
        %490 = vmatprep.subr.mxu0 0.0
        %491 = vmatpush1.msra.mxu0 0.0
        %492 = vmatprep.subr.mxu0 0.0
        %493 = vmatpush1.msra.mxu0 0.0
        %494 = vmatprep.subr.mxu0 0.0
        %495 = vmatpush1.msra.mxu0 0.0
        %496 = vmatprep.subr.mxu0 0.0
        %497 = vmatpush1.msra.mxu0 %v467
        %498 = vmatprep.subr.mxu0 0.0
        %499 = vmatpush1.msra.mxu0 %v466
        %500 = vmatprep.subr.mxu0 0.0
        %501 = vmatpush1.msra.mxu0 %v465
        %502 = vmatprep.subr.mxu0 0.0
        %503 = vmatpush1.msra.mxu0 %v464
        %504 = vmatprep.subr.mxu0 0.0
        %505 = vmatpush2.msra.mxu0 0.0
        %506 = vmatprep.subr.mxu0 0.0
        %507 = vmatpush2.msra.mxu0 0.0
        %508 = vmatprep.subr.mxu0 0.0
        %509 = vmatpush2.msra.mxu0 0.0
        %510 = vmatprep.subr.mxu0 0.0
        %511 = vmatpush2.msra.mxu0 0.0
        %512 = vmatprep.subr.mxu0 0.0
        %513 = vmatpush2.msra.mxu0 0.0
        %514 = vmatprep.subr.mxu0 0.0
        %515 = vmatpush2.msra.mxu0 0.0
        %516 = vmatprep.subr.mxu0 0.0
        %517 = vmatpush2.msra.mxu0 0.0
        %518 = vmatprep.subr.mxu0 0.0
        %519 = vmatpush2.msra.mxu0 0.0
        %520 = vmatprep.subr.mxu0 0.0
        %521 = vmatpush2.msra.mxu0 0.0
        %522 = vmatprep.subr.mxu0 0.0
        %523 = vmatpush2.msra.mxu0 0.0
        %524 = vmatprep.subr.mxu0 0.0
        %525 = vmatpush2.msra.mxu0 0.0
        %526 = vmatprep.subr.mxu0 0.0
        %527 = vmatpush2.msra.mxu0 0.0
        %528 = vmatprep.subr.mxu0 0.0
        %529 = vmatpush2.msra.mxu0 0.0
        %530 = vmatprep.subr.mxu0 0.0
        %531 = vmatpush2.msra.mxu0 0.0
        %532 = vmatprep.subr.mxu0 0.0
        %533 = vmatpush2.msra.mxu0 0.0
        %534 = vmatprep.subr.mxu0 0.0
        %535 = vmatpush2.msra.mxu0 0.0
        %536 = vmatprep.mubr.f32.mxu0 0.0
        %537 = vmatmul.mubr.f32.gmra.mxu0 %v314
        %v538 = vpop.f32.mrf.mxu0
        %v539 = vadd.f32 %v471, %v538
        %v540 = vpop.f32.mrf.mxu0
        %541 = vdwg.mxu0
        %543 = vrot.lane.b32.xlu0 %v383, 120
        %v544 = vpop.permute.xlu0 %543
        %545 = vrot.lane.b32.xlu0 %v383, 112
        %v546 = vpop.permute.xlu0 %545
        %547 = vrot.lane.b32.xlu0 %v383, 104
        %v548 = vpop.permute.xlu0 %547
        %550 = vrot.lane.b32.xlu0 %v461, 120
        %v551 = vpop.permute.xlu0 %550
        %552 = vrot.lane.b32.xlu0 %v461, 112
        %v553 = vpop.permute.xlu0 %552
        %554 = vrot.lane.b32.xlu0 %v461, 104
        %v555 = vpop.permute.xlu0 %554
        %557 = vrot.lane.b32.xlu0 %v539, 120
        %v558 = vpop.permute.xlu0 %557
        %560 = vrot.lane.b32.xlu0 %v539, 112
        %v561 = vpop.permute.xlu0 %560
        %563 = vrot.lane.b32.xlu0 %v539, 104
        %v564 = vpop.permute.xlu0 %563
        %vm566 = vcmask 64512
        %v567 = vsel %vm566, %v383, 0
        %v569 = vsel %vm566, %v461, 0
        %571 = vmatprep.subr.mxu0 0.0
        %572 = vmatpush1.xpose.msra.mxu0 0.0
        %573 = vmatprep.subr.mxu0 0.0
        %574 = vmatpush1.xpose.msra.mxu0 0.0
        %575 = vmatprep.subr.mxu0 0.0
        %576 = vmatpush1.xpose.msra.mxu0 0.0
        %577 = vmatprep.subr.mxu0 0.0
        %578 = vmatpush1.xpose.msra.mxu0 0.0
        %579 = vmatprep.subr.mxu0 0.0
        %580 = vmatpush1.xpose.msra.mxu0 0.0
        %581 = vmatprep.subr.mxu0 0.0
        %582 = vmatpush1.xpose.msra.mxu0 0.0
        %583 = vmatprep.subr.mxu0 0.0
        %584 = vmatpush1.xpose.msra.mxu0 0.0
        %585 = vmatprep.subr.mxu0 0.0
        %586 = vmatpush1.xpose.msra.mxu0 0.0
        %587 = vmatprep.subr.mxu0 0.0
        %588 = vmatpush1.xpose.msra.mxu0 0.0
        %589 = vmatprep.subr.mxu0 0.0
        %590 = vmatpush1.xpose.msra.mxu0 0.0
        %591 = vmatprep.subr.mxu0 0.0
        %592 = vmatpush1.xpose.msra.mxu0 0.0
        %593 = vmatprep.subr.mxu0 0.0
        %594 = vmatpush1.xpose.msra.mxu0 0.0
        %595 = vmatprep.subr.mxu0 0.0
        %596 = vmatpush1.xpose.msra.mxu0 0.0
        %597 = vmatprep.subr.mxu0 0.0
        %598 = vmatpush1.xpose.msra.mxu0 0.0
        %599 = vmatprep.subr.mxu0 0.0
        %600 = vmatpush1.xpose.msra.mxu0 0.0
        %601 = vmatprep.subr.mxu0 0.0
        %602 = vmatpush1.xpose.msra.mxu0 %v569
        %603 = vmatprep.subr.mxu0 0.0
        %604 = vmatpush2.xpose.msra.mxu0 0.0
        %605 = vmatprep.subr.mxu0 0.0
        %606 = vmatpush2.xpose.msra.mxu0 0.0
        %607 = vmatprep.subr.mxu0 0.0
        %608 = vmatpush2.xpose.msra.mxu0 0.0
        %609 = vmatprep.subr.mxu0 0.0
        %610 = vmatpush2.xpose.msra.mxu0 0.0
        %611 = vmatprep.subr.mxu0 0.0
        %612 = vmatpush2.xpose.msra.mxu0 0.0
        %613 = vmatprep.subr.mxu0 0.0
        %614 = vmatpush2.xpose.msra.mxu0 0.0
        %615 = vmatprep.subr.mxu0 0.0
        %616 = vmatpush2.xpose.msra.mxu0 0.0
        %617 = vmatprep.subr.mxu0 0.0
        %618 = vmatpush2.xpose.msra.mxu0 0.0
        %619 = vmatprep.subr.mxu0 0.0
        %620 = vmatpush2.xpose.msra.mxu0 0.0
        %621 = vmatprep.subr.mxu0 0.0
        %622 = vmatpush2.xpose.msra.mxu0 0.0
        %623 = vmatprep.subr.mxu0 0.0
        %624 = vmatpush2.xpose.msra.mxu0 0.0
        %625 = vmatprep.subr.mxu0 0.0
        %626 = vmatpush2.xpose.msra.mxu0 0.0
        %627 = vmatprep.subr.mxu0 0.0
        %628 = vmatpush2.xpose.msra.mxu0 0.0
        %629 = vmatprep.subr.mxu0 0.0
        %630 = vmatpush2.xpose.msra.mxu0 0.0
        %631 = vmatprep.subr.mxu0 0.0
        %632 = vmatpush2.xpose.msra.mxu0 0.0
        %633 = vmatprep.subr.mxu0 0.0
        %634 = vmatpush2.xpose.msra.mxu0 0.0
        %635 = vmatprep.mubr.f32.mxu0 0.0
        %636 = vmatmul.mubr.f32.gmra.mxu0 %v567
        %v637 = vpop.f32.mrf.mxu0
        %v638 = vadd.f32 0.0, %v637
        %v639 = vpop.f32.mrf.mxu0
        %640 = vdwg.mxu0
        %v641 = vsel %vm566, %v544, 0
        %v643 = vsel %vm566, %v551, 0
        %645 = vmatprep.subr.mxu0 0.0
        %646 = vmatpush1.xpose.msra.mxu0 0.0
        %647 = vmatprep.subr.mxu0 0.0
        %648 = vmatpush1.xpose.msra.mxu0 0.0
        %649 = vmatprep.subr.mxu0 0.0
        %650 = vmatpush1.xpose.msra.mxu0 0.0
        %651 = vmatprep.subr.mxu0 0.0
        %652 = vmatpush1.xpose.msra.mxu0 0.0
        %653 = vmatprep.subr.mxu0 0.0
        %654 = vmatpush1.xpose.msra.mxu0 0.0
        %655 = vmatprep.subr.mxu0 0.0
        %656 = vmatpush1.xpose.msra.mxu0 0.0
        %657 = vmatprep.subr.mxu0 0.0
        %658 = vmatpush1.xpose.msra.mxu0 0.0
        %659 = vmatprep.subr.mxu0 0.0
        %660 = vmatpush1.xpose.msra.mxu0 0.0
        %661 = vmatprep.subr.mxu0 0.0
        %662 = vmatpush1.xpose.msra.mxu0 0.0
        %663 = vmatprep.subr.mxu0 0.0
        %664 = vmatpush1.xpose.msra.mxu0 0.0
        %665 = vmatprep.subr.mxu0 0.0
        %666 = vmatpush1.xpose.msra.mxu0 0.0
        %667 = vmatprep.subr.mxu0 0.0
        %668 = vmatpush1.xpose.msra.mxu0 0.0
        %669 = vmatprep.subr.mxu0 0.0
        %670 = vmatpush1.xpose.msra.mxu0 0.0
        %671 = vmatprep.subr.mxu0 0.0
        %672 = vmatpush1.xpose.msra.mxu0 0.0
        %673 = vmatprep.subr.mxu0 0.0
        %674 = vmatpush1.xpose.msra.mxu0 0.0
        %675 = vmatprep.subr.mxu0 0.0
        %676 = vmatpush1.xpose.msra.mxu0 %v643
        %677 = vmatprep.subr.mxu0 0.0
        %678 = vmatpush2.xpose.msra.mxu0 0.0
        %679 = vmatprep.subr.mxu0 0.0
        %680 = vmatpush2.xpose.msra.mxu0 0.0
        %681 = vmatprep.subr.mxu0 0.0
        %682 = vmatpush2.xpose.msra.mxu0 0.0
        %683 = vmatprep.subr.mxu0 0.0
        %684 = vmatpush2.xpose.msra.mxu0 0.0
        %685 = vmatprep.subr.mxu0 0.0
        %686 = vmatpush2.xpose.msra.mxu0 0.0
        %687 = vmatprep.subr.mxu0 0.0
        %688 = vmatpush2.xpose.msra.mxu0 0.0
        %689 = vmatprep.subr.mxu0 0.0
        %690 = vmatpush2.xpose.msra.mxu0 0.0
        %691 = vmatprep.subr.mxu0 0.0
        %692 = vmatpush2.xpose.msra.mxu0 0.0
        %693 = vmatprep.subr.mxu0 0.0
        %694 = vmatpush2.xpose.msra.mxu0 0.0
        %695 = vmatprep.subr.mxu0 0.0
        %696 = vmatpush2.xpose.msra.mxu0 0.0
        %697 = vmatprep.subr.mxu0 0.0
        %698 = vmatpush2.xpose.msra.mxu0 0.0
        %699 = vmatprep.subr.mxu0 0.0
        %700 = vmatpush2.xpose.msra.mxu0 0.0
        %701 = vmatprep.subr.mxu0 0.0
        %702 = vmatpush2.xpose.msra.mxu0 0.0
        %703 = vmatprep.subr.mxu0 0.0
        %704 = vmatpush2.xpose.msra.mxu0 0.0
        %705 = vmatprep.subr.mxu0 0.0
        %706 = vmatpush2.xpose.msra.mxu0 0.0
        %707 = vmatprep.subr.mxu0 0.0
        %708 = vmatpush2.xpose.msra.mxu0 0.0
        %709 = vmatprep.mubr.f32.mxu0 0.0
        %710 = vmatmul.mubr.f32.gmra.mxu0 %v641
        %v711 = vpop.f32.mrf.mxu0
        %v712 = vadd.f32 0.0, %v711
        %v713 = vpop.f32.mrf.mxu0
        %714 = vdwg.mxu0
        %v715 = vsel %vm566, %v546, 0
        %v717 = vsel %vm566, %v553, 0
        %719 = vmatprep.subr.mxu0 0.0
        %720 = vmatpush1.xpose.msra.mxu0 0.0
        %721 = vmatprep.subr.mxu0 0.0
        %722 = vmatpush1.xpose.msra.mxu0 0.0
        %723 = vmatprep.subr.mxu0 0.0
        %724 = vmatpush1.xpose.msra.mxu0 0.0
        %725 = vmatprep.subr.mxu0 0.0
        %726 = vmatpush1.xpose.msra.mxu0 0.0
        %727 = vmatprep.subr.mxu0 0.0
        %728 = vmatpush1.xpose.msra.mxu0 0.0
        %729 = vmatprep.subr.mxu0 0.0
        %730 = vmatpush1.xpose.msra.mxu0 0.0
        %731 = vmatprep.subr.mxu0 0.0
        %732 = vmatpush1.xpose.msra.mxu0 0.0
        %733 = vmatprep.subr.mxu0 0.0
        %734 = vmatpush1.xpose.msra.mxu0 0.0
        %735 = vmatprep.subr.mxu0 0.0
        %736 = vmatpush1.xpose.msra.mxu0 0.0
        %737 = vmatprep.subr.mxu0 0.0
        %738 = vmatpush1.xpose.msra.mxu0 0.0
        %739 = vmatprep.subr.mxu0 0.0
        %740 = vmatpush1.xpose.msra.mxu0 0.0
        %741 = vmatprep.subr.mxu0 0.0
        %742 = vmatpush1.xpose.msra.mxu0 0.0
        %743 = vmatprep.subr.mxu0 0.0
        %744 = vmatpush1.xpose.msra.mxu0 0.0
        %745 = vmatprep.subr.mxu0 0.0
        %746 = vmatpush1.xpose.msra.mxu0 0.0
        %747 = vmatprep.subr.mxu0 0.0
        %748 = vmatpush1.xpose.msra.mxu0 0.0
        %749 = vmatprep.subr.mxu0 0.0
        %750 = vmatpush1.xpose.msra.mxu0 %v717
        %751 = vmatprep.subr.mxu0 0.0
        %752 = vmatpush2.xpose.msra.mxu0 0.0
        %753 = vmatprep.subr.mxu0 0.0
        %754 = vmatpush2.xpose.msra.mxu0 0.0
        %755 = vmatprep.subr.mxu0 0.0
        %756 = vmatpush2.xpose.msra.mxu0 0.0
        %757 = vmatprep.subr.mxu0 0.0
        %758 = vmatpush2.xpose.msra.mxu0 0.0
        %759 = vmatprep.subr.mxu0 0.0
        %760 = vmatpush2.xpose.msra.mxu0 0.0
        %761 = vmatprep.subr.mxu0 0.0
        %762 = vmatpush2.xpose.msra.mxu0 0.0
        %763 = vmatprep.subr.mxu0 0.0
        %764 = vmatpush2.xpose.msra.mxu0 0.0
        %765 = vmatprep.subr.mxu0 0.0
        %766 = vmatpush2.xpose.msra.mxu0 0.0
        %767 = vmatprep.subr.mxu0 0.0
        %768 = vmatpush2.xpose.msra.mxu0 0.0
        %769 = vmatprep.subr.mxu0 0.0
        %770 = vmatpush2.xpose.msra.mxu0 0.0
        %771 = vmatprep.subr.mxu0 0.0
        %772 = vmatpush2.xpose.msra.mxu0 0.0
        %773 = vmatprep.subr.mxu0 0.0
        %774 = vmatpush2.xpose.msra.mxu0 0.0
        %775 = vmatprep.subr.mxu0 0.0
        %776 = vmatpush2.xpose.msra.mxu0 0.0
        %777 = vmatprep.subr.mxu0 0.0
        %778 = vmatpush2.xpose.msra.mxu0 0.0
        %779 = vmatprep.subr.mxu0 0.0
        %780 = vmatpush2.xpose.msra.mxu0 0.0
        %781 = vmatprep.subr.mxu0 0.0
        %782 = vmatpush2.xpose.msra.mxu0 0.0
        %783 = vmatprep.mubr.f32.mxu0 0.0
        %784 = vmatmul.mubr.f32.gmra.mxu0 %v715
        %v785 = vpop.f32.mrf.mxu0
        %v786 = vadd.f32 0.0, %v785
        %v787 = vpop.f32.mrf.mxu0
        %788 = vdwg.mxu0
        %v789 = vsel %vm566, %v548, 0
        %v791 = vsel %vm566, %v555, 0
        %793 = vmatprep.subr.mxu0 0.0
        %794 = vmatpush1.xpose.msra.mxu0 0.0
        %795 = vmatprep.subr.mxu0 0.0
        %796 = vmatpush1.xpose.msra.mxu0 0.0
        %797 = vmatprep.subr.mxu0 0.0
        %798 = vmatpush1.xpose.msra.mxu0 0.0
        %799 = vmatprep.subr.mxu0 0.0
        %800 = vmatpush1.xpose.msra.mxu0 0.0
        %801 = vmatprep.subr.mxu0 0.0
        %802 = vmatpush1.xpose.msra.mxu0 0.0
        %803 = vmatprep.subr.mxu0 0.0
        %804 = vmatpush1.xpose.msra.mxu0 0.0
        %805 = vmatprep.subr.mxu0 0.0
        %806 = vmatpush1.xpose.msra.mxu0 0.0
        %807 = vmatprep.subr.mxu0 0.0
        %808 = vmatpush1.xpose.msra.mxu0 0.0
        %809 = vmatprep.subr.mxu0 0.0
        %810 = vmatpush1.xpose.msra.mxu0 0.0
        %811 = vmatprep.subr.mxu0 0.0
        %812 = vmatpush1.xpose.msra.mxu0 0.0
        %813 = vmatprep.subr.mxu0 0.0
        %814 = vmatpush1.xpose.msra.mxu0 0.0
        %815 = vmatprep.subr.mxu0 0.0
        %816 = vmatpush1.xpose.msra.mxu0 0.0
        %817 = vmatprep.subr.mxu0 0.0
        %818 = vmatpush1.xpose.msra.mxu0 0.0
        %819 = vmatprep.subr.mxu0 0.0
        %820 = vmatpush1.xpose.msra.mxu0 0.0
        %821 = vmatprep.subr.mxu0 0.0
        %822 = vmatpush1.xpose.msra.mxu0 0.0
        %823 = vmatprep.subr.mxu0 0.0
        %824 = vmatpush1.xpose.msra.mxu0 %v791
        %825 = vmatprep.subr.mxu0 0.0
        %826 = vmatpush2.xpose.msra.mxu0 0.0
        %827 = vmatprep.subr.mxu0 0.0
        %828 = vmatpush2.xpose.msra.mxu0 0.0
        %829 = vmatprep.subr.mxu0 0.0
        %830 = vmatpush2.xpose.msra.mxu0 0.0
        %831 = vmatprep.subr.mxu0 0.0
        %832 = vmatpush2.xpose.msra.mxu0 0.0
        %833 = vmatprep.subr.mxu0 0.0
        %834 = vmatpush2.xpose.msra.mxu0 0.0
        %835 = vmatprep.subr.mxu0 0.0
        %836 = vmatpush2.xpose.msra.mxu0 0.0
        %837 = vmatprep.subr.mxu0 0.0
        %838 = vmatpush2.xpose.msra.mxu0 0.0
        %839 = vmatprep.subr.mxu0 0.0
        %840 = vmatpush2.xpose.msra.mxu0 0.0
        %841 = vmatprep.subr.mxu0 0.0
        %842 = vmatpush2.xpose.msra.mxu0 0.0
        %843 = vmatprep.subr.mxu0 0.0
        %844 = vmatpush2.xpose.msra.mxu0 0.0
        %845 = vmatprep.subr.mxu0 0.0
        %846 = vmatpush2.xpose.msra.mxu0 0.0
        %847 = vmatprep.subr.mxu0 0.0
        %848 = vmatpush2.xpose.msra.mxu0 0.0
        %849 = vmatprep.subr.mxu0 0.0
        %850 = vmatpush2.xpose.msra.mxu0 0.0
        %851 = vmatprep.subr.mxu0 0.0
        %852 = vmatpush2.xpose.msra.mxu0 0.0
        %853 = vmatprep.subr.mxu0 0.0
        %854 = vmatpush2.xpose.msra.mxu0 0.0
        %855 = vmatprep.subr.mxu0 0.0
        %856 = vmatpush2.xpose.msra.mxu0 0.0
        %857 = vmatprep.mubr.f32.mxu0 0.0
        %858 = vmatmul.mubr.f32.gmra.mxu0 %v789
        %v859 = vpop.f32.mrf.mxu0
        %v860 = vadd.f32 0.0, %v859
        %v861 = vpop.f32.mrf.mxu0
        %862 = vdwg.mxu0
        %v863 = vsel %vm566, %v638, -inf
        %864 = vmax.xlane.f32.xlu0 %v863
        %v865 = vpop.xlane.xlu0 %864
        %v866 = vsel %vm566, %v712, -inf
        %867 = vmax.xlane.f32.xlu0 %v866
        %v868 = vpop.xlane.xlu0 %867
        %v869 = vsel %vm566, %v786, -inf
        %870 = vmax.xlane.f32.xlu0 %v869
        %v871 = vpop.xlane.xlu0 %870
        %v872 = vsel %vm566, %v860, -inf
        %873 = vmax.xlane.f32.xlu0 %v872
        %v874 = vpop.xlane.xlu0 %873
        %v875 = vsub.f32 %v638, %v865
        %v876 = vsub.f32 %v712, %v868
        %v877 = vsub.f32 %v786, %v871
        %v878 = vsub.f32 %v860, %v874
        %v879 = vmul.f32 %v875, 1.442695
        %v880 = vpow.pop %v879
        %v881 = vmul.f32 %v876, 1.442695
        %v882 = vpow.pop %v881
        %v883 = vmul.f32 %v877, 1.442695
        %v884 = vpow.pop %v883
        %v885 = vmul.f32 %v878, 1.442695
        %v886 = vpow.pop %v885
        %v887 = vsel %vm566, %v880, 0.0
        %888 = vadd.xlane.f32.xlu0 %v887
        %v889 = vpop.xlane.xlu0 %888
        %v890 = vsel %vm566, %v882, 0.0
        %891 = vadd.xlane.f32.xlu0 %v890
        %v892 = vpop.xlane.xlu0 %891
        %v893 = vsel %vm566, %v884, 0.0
        %894 = vadd.xlane.f32.xlu0 %v893
        %v895 = vpop.xlane.xlu0 %894
        %v896 = vsel %vm566, %v886, 0.0
        %897 = vadd.xlane.f32.xlu0 %v896
        %v898 = vpop.xlane.xlu0 %897
        %v899 = vrcp.pop %v889
        %v900 = vrcp.pop %v892
        %v901 = vrcp.pop %v895
        %v902 = vrcp.pop %v898
        %v903 = vmul.f32 %v880, %v899
        %v904 = vmul.f32 %v882, %v900
        %v905 = vmul.f32 %v884, %v901
        %v906 = vmul.f32 %v886, %v902
        %v908 = vsel %vm566, %v903, 0
        %910 = vmatprep.subr.mxu0 0.0
        %911 = vmatpush1.msra.mxu0 0.0
        %912 = vmatprep.subr.mxu0 0.0
        %913 = vmatpush1.msra.mxu0 0.0
        %914 = vmatprep.subr.mxu0 0.0
        %915 = vmatpush1.msra.mxu0 0.0
        %916 = vmatprep.subr.mxu0 0.0
        %917 = vmatpush1.msra.mxu0 0.0
        %918 = vmatprep.subr.mxu0 0.0
        %919 = vmatpush1.msra.mxu0 0.0
        %920 = vmatprep.subr.mxu0 0.0
        %921 = vmatpush1.msra.mxu0 0.0
        %922 = vmatprep.subr.mxu0 0.0
        %923 = vmatpush1.msra.mxu0 0.0
        %924 = vmatprep.subr.mxu0 0.0
        %925 = vmatpush1.msra.mxu0 0.0
        %926 = vmatprep.subr.mxu0 0.0
        %927 = vmatpush1.msra.mxu0 0.0
        %928 = vmatprep.subr.mxu0 0.0
        %929 = vmatpush1.msra.mxu0 0.0
        %930 = vmatprep.subr.mxu0 0.0
        %931 = vmatpush1.msra.mxu0 0.0
        %932 = vmatprep.subr.mxu0 0.0
        %933 = vmatpush1.msra.mxu0 0.0
        %934 = vmatprep.subr.mxu0 0.0
        %935 = vmatpush1.msra.mxu0 0.0
        %936 = vmatprep.subr.mxu0 0.0
        %937 = vmatpush1.msra.mxu0 0.0
        %938 = vmatprep.subr.mxu0 0.0
        %939 = vmatpush1.msra.mxu0 0.0
        %940 = vmatprep.subr.mxu0 0.0
        %941 = vmatpush1.msra.mxu0 %v539
        %942 = vmatprep.subr.mxu0 0.0
        %943 = vmatpush2.msra.mxu0 0.0
        %944 = vmatprep.subr.mxu0 0.0
        %945 = vmatpush2.msra.mxu0 0.0
        %946 = vmatprep.subr.mxu0 0.0
        %947 = vmatpush2.msra.mxu0 0.0
        %948 = vmatprep.subr.mxu0 0.0
        %949 = vmatpush2.msra.mxu0 0.0
        %950 = vmatprep.subr.mxu0 0.0
        %951 = vmatpush2.msra.mxu0 0.0
        %952 = vmatprep.subr.mxu0 0.0
        %953 = vmatpush2.msra.mxu0 0.0
        %954 = vmatprep.subr.mxu0 0.0
        %955 = vmatpush2.msra.mxu0 0.0
        %956 = vmatprep.subr.mxu0 0.0
        %957 = vmatpush2.msra.mxu0 0.0
        %958 = vmatprep.subr.mxu0 0.0
        %959 = vmatpush2.msra.mxu0 0.0
        %960 = vmatprep.subr.mxu0 0.0
        %961 = vmatpush2.msra.mxu0 0.0
        %962 = vmatprep.subr.mxu0 0.0
        %963 = vmatpush2.msra.mxu0 0.0
        %964 = vmatprep.subr.mxu0 0.0
        %965 = vmatpush2.msra.mxu0 0.0
        %966 = vmatprep.subr.mxu0 0.0
        %967 = vmatpush2.msra.mxu0 0.0
        %968 = vmatprep.subr.mxu0 0.0
        %969 = vmatpush2.msra.mxu0 0.0
        %970 = vmatprep.subr.mxu0 0.0
        %971 = vmatpush2.msra.mxu0 0.0
        %972 = vmatprep.subr.mxu0 0.0
        %973 = vmatpush2.msra.mxu0 0.0
        %974 = vmatprep.mubr.f32.mxu0 0.0
        %975 = vmatmul.mubr.f32.gmra.mxu0 %v908
        %v976 = vpop.f32.mrf.mxu0
        %v977 = vadd.f32 0.0, %v976
        %v978 = vpop.f32.mrf.mxu0
        %979 = vdwg.mxu0
        %v981 = vsel %vm566, %v904, 0
        %983 = vmatprep.subr.mxu0 0.0
        %984 = vmatpush1.msra.mxu0 0.0
        %985 = vmatprep.subr.mxu0 0.0
        %986 = vmatpush1.msra.mxu0 0.0
        %987 = vmatprep.subr.mxu0 0.0
        %988 = vmatpush1.msra.mxu0 0.0
        %989 = vmatprep.subr.mxu0 0.0
        %990 = vmatpush1.msra.mxu0 0.0
        %991 = vmatprep.subr.mxu0 0.0
        %992 = vmatpush1.msra.mxu0 0.0
        %993 = vmatprep.subr.mxu0 0.0
        %994 = vmatpush1.msra.mxu0 0.0
        %995 = vmatprep.subr.mxu0 0.0
        %996 = vmatpush1.msra.mxu0 0.0
        %997 = vmatprep.subr.mxu0 0.0
        %998 = vmatpush1.msra.mxu0 0.0
        %999 = vmatprep.subr.mxu0 0.0
        %1000 = vmatpush1.msra.mxu0 0.0
        %1001 = vmatprep.subr.mxu0 0.0
        %1002 = vmatpush1.msra.mxu0 0.0
        %1003 = vmatprep.subr.mxu0 0.0
        %1004 = vmatpush1.msra.mxu0 0.0
        %1005 = vmatprep.subr.mxu0 0.0
        %1006 = vmatpush1.msra.mxu0 0.0
        %1007 = vmatprep.subr.mxu0 0.0
        %1008 = vmatpush1.msra.mxu0 0.0
        %1009 = vmatprep.subr.mxu0 0.0
        %1010 = vmatpush1.msra.mxu0 0.0
        %1011 = vmatprep.subr.mxu0 0.0
        %1012 = vmatpush1.msra.mxu0 0.0
        %1013 = vmatprep.subr.mxu0 0.0
        %1014 = vmatpush1.msra.mxu0 %v558
        %1015 = vmatprep.subr.mxu0 0.0
        %1016 = vmatpush2.msra.mxu0 0.0
        %1017 = vmatprep.subr.mxu0 0.0
        %1018 = vmatpush2.msra.mxu0 0.0
        %1019 = vmatprep.subr.mxu0 0.0
        %1020 = vmatpush2.msra.mxu0 0.0
        %1021 = vmatprep.subr.mxu0 0.0
        %1022 = vmatpush2.msra.mxu0 0.0
        %1023 = vmatprep.subr.mxu0 0.0
        %1024 = vmatpush2.msra.mxu0 0.0
        %1025 = vmatprep.subr.mxu0 0.0
        %1026 = vmatpush2.msra.mxu0 0.0
        %1027 = vmatprep.subr.mxu0 0.0
        %1028 = vmatpush2.msra.mxu0 0.0
        %1029 = vmatprep.subr.mxu0 0.0
        %1030 = vmatpush2.msra.mxu0 0.0
        %1031 = vmatprep.subr.mxu0 0.0
        %1032 = vmatpush2.msra.mxu0 0.0
        %1033 = vmatprep.subr.mxu0 0.0
        %1034 = vmatpush2.msra.mxu0 0.0
        %1035 = vmatprep.subr.mxu0 0.0
        %1036 = vmatpush2.msra.mxu0 0.0
        %1037 = vmatprep.subr.mxu0 0.0
        %1038 = vmatpush2.msra.mxu0 0.0
        %1039 = vmatprep.subr.mxu0 0.0
        %1040 = vmatpush2.msra.mxu0 0.0
        %1041 = vmatprep.subr.mxu0 0.0
        %1042 = vmatpush2.msra.mxu0 0.0
        %1043 = vmatprep.subr.mxu0 0.0
        %1044 = vmatpush2.msra.mxu0 0.0
        %1045 = vmatprep.subr.mxu0 0.0
        %1046 = vmatpush2.msra.mxu0 0.0
        %1047 = vmatprep.mubr.f32.mxu0 0.0
        %1048 = vmatmul.mubr.f32.gmra.mxu0 %v981
        %v1049 = vpop.f32.mrf.mxu0
        %v1050 = vadd.f32 0.0, %v1049
        %v1051 = vpop.f32.mrf.mxu0
        %1052 = vdwg.mxu0
        %v1054 = vsel %vm566, %v905, 0
        %1056 = vmatprep.subr.mxu0 0.0
        %1057 = vmatpush1.msra.mxu0 0.0
        %1058 = vmatprep.subr.mxu0 0.0
        %1059 = vmatpush1.msra.mxu0 0.0
        %1060 = vmatprep.subr.mxu0 0.0
        %1061 = vmatpush1.msra.mxu0 0.0
        %1062 = vmatprep.subr.mxu0 0.0
        %1063 = vmatpush1.msra.mxu0 0.0
        %1064 = vmatprep.subr.mxu0 0.0
        %1065 = vmatpush1.msra.mxu0 0.0
        %1066 = vmatprep.subr.mxu0 0.0
        %1067 = vmatpush1.msra.mxu0 0.0
        %1068 = vmatprep.subr.mxu0 0.0
        %1069 = vmatpush1.msra.mxu0 0.0
        %1070 = vmatprep.subr.mxu0 0.0
        %1071 = vmatpush1.msra.mxu0 0.0
        %1072 = vmatprep.subr.mxu0 0.0
        %1073 = vmatpush1.msra.mxu0 0.0
        %1074 = vmatprep.subr.mxu0 0.0
        %1075 = vmatpush1.msra.mxu0 0.0
        %1076 = vmatprep.subr.mxu0 0.0
        %1077 = vmatpush1.msra.mxu0 0.0
        %1078 = vmatprep.subr.mxu0 0.0
        %1079 = vmatpush1.msra.mxu0 0.0
        %1080 = vmatprep.subr.mxu0 0.0
        %1081 = vmatpush1.msra.mxu0 0.0
        %1082 = vmatprep.subr.mxu0 0.0
        %1083 = vmatpush1.msra.mxu0 0.0
        %1084 = vmatprep.subr.mxu0 0.0
        %1085 = vmatpush1.msra.mxu0 0.0
        %1086 = vmatprep.subr.mxu0 0.0
        %1087 = vmatpush1.msra.mxu0 %v561
        %1088 = vmatprep.subr.mxu0 0.0
        %1089 = vmatpush2.msra.mxu0 0.0
        %1090 = vmatprep.subr.mxu0 0.0
        %1091 = vmatpush2.msra.mxu0 0.0
        %1092 = vmatprep.subr.mxu0 0.0
        %1093 = vmatpush2.msra.mxu0 0.0
        %1094 = vmatprep.subr.mxu0 0.0
        %1095 = vmatpush2.msra.mxu0 0.0
        %1096 = vmatprep.subr.mxu0 0.0
        %1097 = vmatpush2.msra.mxu0 0.0
        %1098 = vmatprep.subr.mxu0 0.0
        %1099 = vmatpush2.msra.mxu0 0.0
        %1100 = vmatprep.subr.mxu0 0.0
        %1101 = vmatpush2.msra.mxu0 0.0
        %1102 = vmatprep.subr.mxu0 0.0
        %1103 = vmatpush2.msra.mxu0 0.0
        %1104 = vmatprep.subr.mxu0 0.0
        %1105 = vmatpush2.msra.mxu0 0.0
        %1106 = vmatprep.subr.mxu0 0.0
        %1107 = vmatpush2.msra.mxu0 0.0
        %1108 = vmatprep.subr.mxu0 0.0
        %1109 = vmatpush2.msra.mxu0 0.0
        %1110 = vmatprep.subr.mxu0 0.0
        %1111 = vmatpush2.msra.mxu0 0.0
        %1112 = vmatprep.subr.mxu0 0.0
        %1113 = vmatpush2.msra.mxu0 0.0
        %1114 = vmatprep.subr.mxu0 0.0
        %1115 = vmatpush2.msra.mxu0 0.0
        %1116 = vmatprep.subr.mxu0 0.0
        %1117 = vmatpush2.msra.mxu0 0.0
        %1118 = vmatprep.subr.mxu0 0.0
        %1119 = vmatpush2.msra.mxu0 0.0
        %1120 = vmatprep.mubr.f32.mxu0 0.0
        %1121 = vmatmul.mubr.f32.gmra.mxu0 %v1054
        %v1122 = vpop.f32.mrf.mxu0
        %v1123 = vadd.f32 0.0, %v1122
        %v1124 = vpop.f32.mrf.mxu0
        %1125 = vdwg.mxu0
        %v1127 = vsel %vm566, %v906, 0
        %1129 = vmatprep.subr.mxu0 0.0
        %1130 = vmatpush1.msra.mxu0 0.0
        %1131 = vmatprep.subr.mxu0 0.0
        %1132 = vmatpush1.msra.mxu0 0.0
        %1133 = vmatprep.subr.mxu0 0.0
        %1134 = vmatpush1.msra.mxu0 0.0
        %1135 = vmatprep.subr.mxu0 0.0
        %1136 = vmatpush1.msra.mxu0 0.0
        %1137 = vmatprep.subr.mxu0 0.0
        %1138 = vmatpush1.msra.mxu0 0.0
        %1139 = vmatprep.subr.mxu0 0.0
        %1140 = vmatpush1.msra.mxu0 0.0
        %1141 = vmatprep.subr.mxu0 0.0
        %1142 = vmatpush1.msra.mxu0 0.0
        %1143 = vmatprep.subr.mxu0 0.0
        %1144 = vmatpush1.msra.mxu0 0.0
        %1145 = vmatprep.subr.mxu0 0.0
        %1146 = vmatpush1.msra.mxu0 0.0
        %1147 = vmatprep.subr.mxu0 0.0
        %1148 = vmatpush1.msra.mxu0 0.0
        %1149 = vmatprep.subr.mxu0 0.0
        %1150 = vmatpush1.msra.mxu0 0.0
        %1151 = vmatprep.subr.mxu0 0.0
        %1152 = vmatpush1.msra.mxu0 0.0
        %1153 = vmatprep.subr.mxu0 0.0
        %1154 = vmatpush1.msra.mxu0 0.0
        %1155 = vmatprep.subr.mxu0 0.0
        %1156 = vmatpush1.msra.mxu0 0.0
        %1157 = vmatprep.subr.mxu0 0.0
        %1158 = vmatpush1.msra.mxu0 0.0
        %1159 = vmatprep.subr.mxu0 0.0
        %1160 = vmatpush1.msra.mxu0 %v564
        %1161 = vmatprep.subr.mxu0 0.0
        %1162 = vmatpush2.msra.mxu0 0.0
        %1163 = vmatprep.subr.mxu0 0.0
        %1164 = vmatpush2.msra.mxu0 0.0
        %1165 = vmatprep.subr.mxu0 0.0
        %1166 = vmatpush2.msra.mxu0 0.0
        %1167 = vmatprep.subr.mxu0 0.0
        %1168 = vmatpush2.msra.mxu0 0.0
        %1169 = vmatprep.subr.mxu0 0.0
        %1170 = vmatpush2.msra.mxu0 0.0
        %1171 = vmatprep.subr.mxu0 0.0
        %1172 = vmatpush2.msra.mxu0 0.0
        %1173 = vmatprep.subr.mxu0 0.0
        %1174 = vmatpush2.msra.mxu0 0.0
        %1175 = vmatprep.subr.mxu0 0.0
        %1176 = vmatpush2.msra.mxu0 0.0
        %1177 = vmatprep.subr.mxu0 0.0
        %1178 = vmatpush2.msra.mxu0 0.0
        %1179 = vmatprep.subr.mxu0 0.0
        %1180 = vmatpush2.msra.mxu0 0.0
        %1181 = vmatprep.subr.mxu0 0.0
        %1182 = vmatpush2.msra.mxu0 0.0
        %1183 = vmatprep.subr.mxu0 0.0
        %1184 = vmatpush2.msra.mxu0 0.0
        %1185 = vmatprep.subr.mxu0 0.0
        %1186 = vmatpush2.msra.mxu0 0.0
        %1187 = vmatprep.subr.mxu0 0.0
        %1188 = vmatpush2.msra.mxu0 0.0
        %1189 = vmatprep.subr.mxu0 0.0
        %1190 = vmatpush2.msra.mxu0 0.0
        %1191 = vmatprep.subr.mxu0 0.0
        %1192 = vmatpush2.msra.mxu0 0.0
        %1193 = vmatprep.mubr.f32.mxu0 0.0
        %1194 = vmatmul.mubr.f32.gmra.mxu0 %v1127
        %v1195 = vpop.f32.mrf.mxu0
        %v1196 = vadd.f32 0.0, %v1195
        %v1197 = vpop.f32.mrf.mxu0
        %1198 = vdwg.mxu0
        %1200 = vrot.lane.b32.xlu0 %v1050, 8
        %v1201 = vpop.permute.xlu0 %1200
        %1204 = vrot.lane.b32.xlu0 %v1123, 16
        %v1205 = vpop.permute.xlu0 %1204
        %1208 = vrot.lane.b32.xlu0 %v1196, 24
        %v1209 = vpop.permute.xlu0 %1208
        %v1211 = vsel %vm566, %v977, %v1201
        %vm1212 = vcmask 130048
        %v1213 = vsel %vm1212, %v1211, %v1205
        %vm1214 = vcmask 195584
        %v1215 = vsel %vm1214, %v1213, %v1209
        %v1216 = vld [vmem:[%s4] sm:$0xff]
        %v1217 = vld [vmem:[%s4 + $0x8] sm:$0xff]
        %v1218 = vld [vmem:[%s4 + $0x10] sm:$0xff]
        %v1219 = vld [vmem:[%s4 + $0x18] sm:$0xff]
        %v1220 = vlaneseq
        %v1221 = vshrl.u32 %v1220, 7
        %v1222 = vsub.s32 3, %v1221
        %v1223 = vrot.slane %v302, %v1222
        %v1225 = vsel %vm312, %v1215, 0
        %1227 = vmatprep.subr.mxu0 0.0
        %1228 = vmatpush1.msra.mxu0 0.0
        %1229 = vmatprep.subr.mxu0 0.0
        %1230 = vmatpush1.msra.mxu0 0.0
        %1231 = vmatprep.subr.mxu0 0.0
        %1232 = vmatpush1.msra.mxu0 0.0
        %1233 = vmatprep.subr.mxu0 0.0
        %1234 = vmatpush1.msra.mxu0 0.0
        %1235 = vmatprep.subr.mxu0 0.0
        %1236 = vmatpush1.msra.mxu0 0.0
        %1237 = vmatprep.subr.mxu0 0.0
        %1238 = vmatpush1.msra.mxu0 0.0
        %1239 = vmatprep.subr.mxu0 0.0
        %1240 = vmatpush1.msra.mxu0 0.0
        %1241 = vmatprep.subr.mxu0 0.0
        %1242 = vmatpush1.msra.mxu0 0.0
        %1243 = vmatprep.subr.mxu0 0.0
        %1244 = vmatpush1.msra.mxu0 0.0
        %1245 = vmatprep.subr.mxu0 0.0
        %1246 = vmatpush1.msra.mxu0 0.0
        %1247 = vmatprep.subr.mxu0 0.0
        %1248 = vmatpush1.msra.mxu0 0.0
        %1249 = vmatprep.subr.mxu0 0.0
        %1250 = vmatpush1.msra.mxu0 0.0
        %1251 = vmatprep.subr.mxu0 0.0
        %1252 = vmatpush1.msra.mxu0 %v1219
        %1253 = vmatprep.subr.mxu0 0.0
        %1254 = vmatpush1.msra.mxu0 %v1218
        %1255 = vmatprep.subr.mxu0 0.0
        %1256 = vmatpush1.msra.mxu0 %v1217
        %1257 = vmatprep.subr.mxu0 0.0
        %1258 = vmatpush1.msra.mxu0 %v1216
        %1259 = vmatprep.subr.mxu0 0.0
        %1260 = vmatpush2.msra.mxu0 0.0
        %1261 = vmatprep.subr.mxu0 0.0
        %1262 = vmatpush2.msra.mxu0 0.0
        %1263 = vmatprep.subr.mxu0 0.0
        %1264 = vmatpush2.msra.mxu0 0.0
        %1265 = vmatprep.subr.mxu0 0.0
        %1266 = vmatpush2.msra.mxu0 0.0
        %1267 = vmatprep.subr.mxu0 0.0
        %1268 = vmatpush2.msra.mxu0 0.0
        %1269 = vmatprep.subr.mxu0 0.0
        %1270 = vmatpush2.msra.mxu0 0.0
        %1271 = vmatprep.subr.mxu0 0.0
        %1272 = vmatpush2.msra.mxu0 0.0
        %1273 = vmatprep.subr.mxu0 0.0
        %1274 = vmatpush2.msra.mxu0 0.0
        %1275 = vmatprep.subr.mxu0 0.0
        %1276 = vmatpush2.msra.mxu0 0.0
        %1277 = vmatprep.subr.mxu0 0.0
        %1278 = vmatpush2.msra.mxu0 0.0
        %1279 = vmatprep.subr.mxu0 0.0
        %1280 = vmatpush2.msra.mxu0 0.0
        %1281 = vmatprep.subr.mxu0 0.0
        %1282 = vmatpush2.msra.mxu0 0.0
        %1283 = vmatprep.subr.mxu0 0.0
        %1284 = vmatpush2.msra.mxu0 0.0
        %1285 = vmatprep.subr.mxu0 0.0
        %1286 = vmatpush2.msra.mxu0 0.0
        %1287 = vmatprep.subr.mxu0 0.0
        %1288 = vmatpush2.msra.mxu0 0.0
        %1289 = vmatprep.subr.mxu0 0.0
        %1290 = vmatpush2.msra.mxu0 0.0
        %1291 = vmatprep.mubr.f32.mxu0 0.0
        %1292 = vmatmul.mubr.f32.gmra.mxu0 %v1225
        %v1293 = vpop.f32.mrf.mxu0
        %v1294 = vadd.f32 %v1223, %v1293
        %v1295 = vpop.f32.mrf.mxu0
        %1296 = vdwg.mxu0
        %v1297 = vadd.f32 %v301, %v1294
        %v1298 = vsel %vm312, %v1297, 0.0
        %1299 = vadd.xlane.f32.xlu0 %v1298
        %v1300 = vpop.xlane.xlu0 %1299
        %v1301 = vrcp.pop 32.0
        %v1302 = vmul.f32 %v1300, %v1301
        %v1303 = vsub.f32 %v1297, %v1302
        %v1304 = vmul.f32 %v1303, %v1303
        %v1305 = vsel %vm312, %v1304, 0.0
        %1306 = vadd.xlane.f32.xlu0 %v1305
        %v1307 = vpop.xlane.xlu0 %1306
        %v1308 = vmul.f32 %v1307, %v1301
        %v1309 = vadd.f32 %v1308, 1e-05
        %v1310 = vrsqrt.pop %v1309
        %v1311 = vmul.f32 %v1303, %v1310
        %v1312 = vlaneseq
        %v1313 = vshrl.u32 %v1312, 7
        %v1314 = vsub.s32 4, %v1313
        %v1315 = vrot.slane %v302, %v1314
        %v1316 = vmul.f32 %v1311, %v1315
        %v1317 = vlaneseq
        %v1318 = vshrl.u32 %v1317, 7
        %v1319 = vsub.s32 5, %v1318
        %v1320 = vrot.slane %v302, %v1319
        %v1321 = vadd.f32 %v1316, %v1320
        %v1322 = vld [vmem:[%s5] sm:$0xff]
        %v1323 = vld [vmem:[%s5 + $0x8] sm:$0xff]
        %v1324 = vld [vmem:[%s5 + $0x10] sm:$0xff]
        %v1325 = vld [vmem:[%s5 + $0x18] sm:$0xff]
        %v1326 = vlaneseq
        %v1327 = vshrl.u32 %v1326, 7
        %v1328 = vsub.s32 6, %v1327
        %v1329 = vrot.slane %v302, %v1328
        %v1331 = vsel %vm312, %v1321, 0
        %1333 = vmatprep.subr.mxu0 0.0
        %1334 = vmatpush1.msra.mxu0 0.0
        %1335 = vmatprep.subr.mxu0 0.0
        %1336 = vmatpush1.msra.mxu0 0.0
        %1337 = vmatprep.subr.mxu0 0.0
        %1338 = vmatpush1.msra.mxu0 0.0
        %1339 = vmatprep.subr.mxu0 0.0
        %1340 = vmatpush1.msra.mxu0 0.0
        %1341 = vmatprep.subr.mxu0 0.0
        %1342 = vmatpush1.msra.mxu0 0.0
        %1343 = vmatprep.subr.mxu0 0.0
        %1344 = vmatpush1.msra.mxu0 0.0
        %1345 = vmatprep.subr.mxu0 0.0
        %1346 = vmatpush1.msra.mxu0 0.0
        %1347 = vmatprep.subr.mxu0 0.0
        %1348 = vmatpush1.msra.mxu0 0.0
        %1349 = vmatprep.subr.mxu0 0.0
        %1350 = vmatpush1.msra.mxu0 0.0
        %1351 = vmatprep.subr.mxu0 0.0
        %1352 = vmatpush1.msra.mxu0 0.0
        %1353 = vmatprep.subr.mxu0 0.0
        %1354 = vmatpush1.msra.mxu0 0.0
        %1355 = vmatprep.subr.mxu0 0.0
        %1356 = vmatpush1.msra.mxu0 0.0
        %1357 = vmatprep.subr.mxu0 0.0
        %1358 = vmatpush1.msra.mxu0 %v1325
        %1359 = vmatprep.subr.mxu0 0.0
        %1360 = vmatpush1.msra.mxu0 %v1324
        %1361 = vmatprep.subr.mxu0 0.0
        %1362 = vmatpush1.msra.mxu0 %v1323
        %1363 = vmatprep.subr.mxu0 0.0
        %1364 = vmatpush1.msra.mxu0 %v1322
        %1365 = vmatprep.subr.mxu0 0.0
        %1366 = vmatpush2.msra.mxu0 0.0
        %1367 = vmatprep.subr.mxu0 0.0
        %1368 = vmatpush2.msra.mxu0 0.0
        %1369 = vmatprep.subr.mxu0 0.0
        %1370 = vmatpush2.msra.mxu0 0.0
        %1371 = vmatprep.subr.mxu0 0.0
        %1372 = vmatpush2.msra.mxu0 0.0
        %1373 = vmatprep.subr.mxu0 0.0
        %1374 = vmatpush2.msra.mxu0 0.0
        %1375 = vmatprep.subr.mxu0 0.0
        %1376 = vmatpush2.msra.mxu0 0.0
        %1377 = vmatprep.subr.mxu0 0.0
        %1378 = vmatpush2.msra.mxu0 0.0
        %1379 = vmatprep.subr.mxu0 0.0
        %1380 = vmatpush2.msra.mxu0 0.0
        %1381 = vmatprep.subr.mxu0 0.0
        %1382 = vmatpush2.msra.mxu0 0.0
        %1383 = vmatprep.subr.mxu0 0.0
        %1384 = vmatpush2.msra.mxu0 0.0
        %1385 = vmatprep.subr.mxu0 0.0
        %1386 = vmatpush2.msra.mxu0 0.0
        %1387 = vmatprep.subr.mxu0 0.0
        %1388 = vmatpush2.msra.mxu0 0.0
        %1389 = vmatprep.subr.mxu0 0.0
        %1390 = vmatpush2.msra.mxu0 0.0
        %1391 = vmatprep.subr.mxu0 0.0
        %1392 = vmatpush2.msra.mxu0 0.0
        %1393 = vmatprep.subr.mxu0 0.0
        %1394 = vmatpush2.msra.mxu0 0.0
        %1395 = vmatprep.subr.mxu0 0.0
        %1396 = vmatpush2.msra.mxu0 0.0
        %1397 = vmatprep.mubr.f32.mxu0 0.0
        %1398 = vmatmul.mubr.f32.gmra.mxu0 %v1331
        %v1399 = vpop.f32.mrf.mxu0
        %v1400 = vadd.f32 %v1329, %v1399
        %v1401 = vpop.f32.mrf.mxu0
        %1402 = vdwg.mxu0
        %v1403 = vmax.f32 %v1400, 0.0
        %v1404 = vld [vmem:[%s6] sm:$0xff]
        %v1405 = vld [vmem:[%s6 + $0x8] sm:$0xff]
        %v1406 = vld [vmem:[%s6 + $0x10] sm:$0xff]
        %v1407 = vld [vmem:[%s6 + $0x18] sm:$0xff]
        %v1408 = vld [vmem:[%s6 + $0x20] sm:$0xff]
        %v1409 = vld [vmem:[%s6 + $0x28] sm:$0xff]
        %v1410 = vld [vmem:[%s6 + $0x30] sm:$0xff]
        %v1411 = vld [vmem:[%s6 + $0x38] sm:$0xff]
        %v1412 = vlaneseq
        %v1413 = vshrl.u32 %v1412, 7
        %v1414 = vsub.s32 7, %v1413
        %v1415 = vrot.slane %v302, %v1414
        %vm1416 = vcmask 523264
        %v1418 = vsel %vm1416, %v1403, 0
        %1420 = vmatprep.subr.mxu0 0.0
        %1421 = vmatpush1.msra.mxu0 0.0
        %1422 = vmatprep.subr.mxu0 0.0
        %1423 = vmatpush1.msra.mxu0 0.0
        %1424 = vmatprep.subr.mxu0 0.0
        %1425 = vmatpush1.msra.mxu0 0.0
        %1426 = vmatprep.subr.mxu0 0.0
        %1427 = vmatpush1.msra.mxu0 0.0
        %1428 = vmatprep.subr.mxu0 0.0
        %1429 = vmatpush1.msra.mxu0 0.0
        %1430 = vmatprep.subr.mxu0 0.0
        %1431 = vmatpush1.msra.mxu0 0.0
        %1432 = vmatprep.subr.mxu0 0.0
        %1433 = vmatpush1.msra.mxu0 0.0
        %1434 = vmatprep.subr.mxu0 0.0
        %1435 = vmatpush1.msra.mxu0 0.0
        %1436 = vmatprep.subr.mxu0 0.0
        %1437 = vmatpush1.msra.mxu0 %v1411
        %1438 = vmatprep.subr.mxu0 0.0
        %1439 = vmatpush1.msra.mxu0 %v1410
        %1440 = vmatprep.subr.mxu0 0.0
        %1441 = vmatpush1.msra.mxu0 %v1409
        %1442 = vmatprep.subr.mxu0 0.0
        %1443 = vmatpush1.msra.mxu0 %v1408
        %1444 = vmatprep.subr.mxu0 0.0
        %1445 = vmatpush1.msra.mxu0 %v1407
        %1446 = vmatprep.subr.mxu0 0.0
        %1447 = vmatpush1.msra.mxu0 %v1406
        %1448 = vmatprep.subr.mxu0 0.0
        %1449 = vmatpush1.msra.mxu0 %v1405
        %1450 = vmatprep.subr.mxu0 0.0
        %1451 = vmatpush1.msra.mxu0 %v1404
        %1452 = vmatprep.subr.mxu0 0.0
        %1453 = vmatpush2.msra.mxu0 0.0
        %1454 = vmatprep.subr.mxu0 0.0
        %1455 = vmatpush2.msra.mxu0 0.0
        %1456 = vmatprep.subr.mxu0 0.0
        %1457 = vmatpush2.msra.mxu0 0.0
        %1458 = vmatprep.subr.mxu0 0.0
        %1459 = vmatpush2.msra.mxu0 0.0
        %1460 = vmatprep.subr.mxu0 0.0
        %1461 = vmatpush2.msra.mxu0 0.0
        %1462 = vmatprep.subr.mxu0 0.0
        %1463 = vmatpush2.msra.mxu0 0.0
        %1464 = vmatprep.subr.mxu0 0.0
        %1465 = vmatpush2.msra.mxu0 0.0
        %1466 = vmatprep.subr.mxu0 0.0
        %1467 = vmatpush2.msra.mxu0 0.0
        %1468 = vmatprep.subr.mxu0 0.0
        %1469 = vmatpush2.msra.mxu0 0.0
        %1470 = vmatprep.subr.mxu0 0.0
        %1471 = vmatpush2.msra.mxu0 0.0
        %1472 = vmatprep.subr.mxu0 0.0
        %1473 = vmatpush2.msra.mxu0 0.0
        %1474 = vmatprep.subr.mxu0 0.0
        %1475 = vmatpush2.msra.mxu0 0.0
        %1476 = vmatprep.subr.mxu0 0.0
        %1477 = vmatpush2.msra.mxu0 0.0
        %1478 = vmatprep.subr.mxu0 0.0
        %1479 = vmatpush2.msra.mxu0 0.0
        %1480 = vmatprep.subr.mxu0 0.0
        %1481 = vmatpush2.msra.mxu0 0.0
        %1482 = vmatprep.subr.mxu0 0.0
        %1483 = vmatpush2.msra.mxu0 0.0
        %1484 = vmatprep.mubr.f32.mxu0 0.0
        %1485 = vmatmul.mubr.f32.gmra.mxu0 %v1418
        %v1486 = vpop.f32.mrf.mxu0
        %v1487 = vadd.f32 %v1415, %v1486
        %v1488 = vpop.f32.mrf.mxu0
        %1489 = vdwg.mxu0
        %v1490 = vadd.f32 %v1487, %v1321
        %v1491 = vsel %vm312, %v1490, 0.0
        %1492 = vadd.xlane.f32.xlu0 %v1491
        %v1493 = vpop.xlane.xlu0 %1492
        %v1494 = vmul.f32 %v1493, %v1301
        %v1495 = vsub.f32 %v1490, %v1494
        %v1496 = vmul.f32 %v1495, %v1495
        %v1497 = vsel %vm312, %v1496, 0.0
        %1498 = vadd.xlane.f32.xlu0 %v1497
        %v1499 = vpop.xlane.xlu0 %1498
        %v1500 = vmul.f32 %v1499, %v1301
        %v1501 = vadd.f32 %v1500, 1e-05
        %v1502 = vrsqrt.pop %v1501
        %v1503 = vmul.f32 %v1495, %v1502
        %v1504 = vlaneseq
        %v1505 = vshrl.u32 %v1504, 7
        %v1506 = vsub.s32 0, %v1505
        %v1507 = vrot.slane %v303, %v1506
        %v1508 = vmul.f32 %v1503, %v1507
        %v1509 = vlaneseq
        %v1510 = vshrl.u32 %v1509, 7
        %v1511 = vsub.s32 1, %v1510
        %v1512 = vrot.slane %v303, %v1511
        %v1513 = vadd.f32 %v1508, %v1512
        %1514 = vst.msk [vmem:[%s296] sm:$0xff] %vm312, %v1513
        %s1515 = sand.u32 %s203, 1
        %s1516 = scalar_lea.sflag [#allocation3], %s1515
        %s1517 = sand.u32 %s203, 1
        %s1518 = smul.addr %s1517, 8
        %s1519 = scalar_lea.vmem [#allocation2], %s1518
        // Predicated region
        $region53: #{encoder_block.1} parent=51 // pred_check
          %p1520 = pneg %p213
        $region54: #{encoder_block.1} parent=51 // pred_check_branch
          %1522 = sbr.rel (%p1520) target = $region56
        $region55: #{encoder_block.1} parent=51 // pred_region
          %s1524 = ssub.s32 128, 128
          %1525 = vsyncadd %s1516, %s1524
          %s1526 = smul.addr %s22, 128
          %s1527 = scalar_lea.hbm %s8, %s1526
          %s1529 = sshll.u32 %s1519, 4
          %s1530 = int_to_ptr.vmem [resolvable:$true] %s1529
          %1532 = dma.vmem_to_hbm [thread:$0]  %s1530, 128, %s1527, %s1516
        $region56: #{encoder_block.1} parent=51 // pred_fallthru
          _
      $region52: #{encoder_block.1} parent=5 // pred_fallthru
        _
      %p1533 = scmp.le.s32.totalorder 2, %s17
      // Predicated region
      $region57: #{encoder_block.1} parent=5 // pred_check
        %p1534 = pneg %p1533
      $region58: #{encoder_block.1} parent=5 // pred_check_branch
        %1536 = sbr.rel (%p1534) target = $region60
      $region59: #{encoder_block.1} parent=5 // pred_region
        %s1537 = ssub.s32 %s17, 2
        // Predicated region
        $region61: #{encoder_block.1} parent=59 // pred_check
          %p1538 = pneg %p219
        $region62: #{encoder_block.1} parent=59 // pred_check_branch
          %1540 = sbr.rel (%p1538) target = $region64
        $region63: #{encoder_block.1} parent=59 // pred_region
          %s1541 = sand.u32 %s204, 1
          %s1542 = scalar_lea.sflag [#allocation3], %s1541
          %s1543 = sand.u32 %s204, 1
          %s1544 = smul.addr %s1543, 8
          %s1545 = scalar_lea.vmem [#allocation2], %s1544
          %1546 = dma.done %s1542, 128
        $region64: #{encoder_block.1} parent=59 // pred_fallthru
          _
      $region60: #{encoder_block.1} parent=5 // pred_fallthru
        _
    $region6: #{encoder_block.1} parent=1 // loop_footer
      %s21 = sadd.s32 1, %s17
    $region7: #{encoder_block.1} parent=1 // loop_footer_branch
      %16 = sbr.rel target = $region3
    $region8: #{encoder_block.1} parent=1 // loop_exit
      _
    %1547 = vsyncpa [#allocation3], 1
    %s1548 = scalar_lea.sflag [#allocation3], 1
    %1549 = vsyncpa %s1548, 1

</llo_original>
